<compile_context>
chip_gen: v5e
topology: v5e:2x2
jax: 0.10.0
libtpu: 0.0.40
codegen_flags: <defaults>
</compile_context>

<pallas_src>
import functools

import jax
import jax.numpy as jnp
from jax.experimental import pallas as pl
from jax.experimental.pallas import tpu as pltpu


def _gelu(x):
    # tanh-approximation GELU (same formula used in kernel and reference).
    # TODO(synk): torch F.gelu defaults to the exact erf form; the tanh
    # approximation (|diff| ~1e-3) is used for guaranteed Mosaic lowering.
    c = jnp.float32(0.7978845608028654)  # sqrt(2/pi)
    return 0.5 * x * (1.0 + jnp.tanh(c * (x + 0.044715 * (x * x * x))))


def _feedforward_kernel(x_ref, w1_ref, dwk_ref, w2_ref, o_ref, hpad_ref, *, H, W):
    # x_ref:    (1, H*W, C)   spatial positions on sublanes, channels on lanes
    # w1_ref:   (C, F)        project_in  (1x1 conv, bias-free)
    # dwk_ref:  (9, F)        3x3 depthwise kernel, tap-major, channels on lanes
    # w2_ref:   (F, C)        project_out (1x1 conv, bias-free)
    # o_ref:    (1, H*W, C)
    # hpad_ref: VMEM (H+2, W+2, F) f32 scratch (zero-padded hidden feature map)
    F_ = w1_ref.shape[1]

    # ---- project_in (MXU) + GELU --------------------------------------------
    x = x_ref[0].astype(jnp.float32)                              # (HW, C)
    h = jnp.dot(x, w1_ref[...].astype(jnp.float32),
                preferred_element_type=jnp.float32)               # (HW, F)
    h = _gelu(h)

    # ---- 3x3 depthwise conv, padding=1 (VPU) --------------------------------
    hpad_ref[...] = jnp.zeros_like(hpad_ref)
    hpad_ref[1:H + 1, 1:W + 1, :] = h.reshape(H, W, F_)

    acc = jnp.zeros((H, W, F_), jnp.float32)
    for kh in range(3):
        for kw in range(3):
            tap = hpad_ref[kh:kh + H, kw:kw + W, :]               # (H, W, F)
            acc = acc + tap * dwk_ref[kh * 3 + kw].astype(jnp.float32)
    acc = _gelu(acc)

    # ---- project_out (MXU) --------------------------------------------------
    out = jnp.dot(acc.reshape(H * W, F_), w2_ref[...].astype(jnp.float32),
                  preferred_element_type=jnp.float32)             # (HW, C)
    o_ref[0] = out.astype(o_ref.dtype)


@jax.jit
def feedforward(x, w1, dwk, w2):
    """x: (B,H,W,C); w1: (C,F); dwk: (3,3,F); w2: (F,C) -> (B,H,W,C)."""
    B, H, W, C = x.shape
    F_ = w1.shape[1]
    HW = H * W

    x2 = x.reshape(B, HW, C)          # free reshape (no transpose, no HBM copy)
    dwk9 = dwk.reshape(9, F_)

    kernel = functools.partial(_feedforward_kernel, H=H, W=W)
    # TODO(synk): for large H*W, tile H across the grid with a 1-row halo so the
    # per-image hidden map stays under the v7x 32 MiB scoped-VMEM default.
    out2 = pl.pallas_call(
        kernel,
        out_shape=jax.ShapeDtypeStruct((B, HW, C), x.dtype),
        grid_spec=pltpu.PrefetchScalarGridSpec(
            num_scalar_prefetch=0,
            grid=(B,),
            in_specs=[
                pl.BlockSpec((1, HW, C), lambda b: (b, 0, 0)),
                pl.BlockSpec((C, F_), lambda b: (0, 0)),
                pl.BlockSpec((9, F_), lambda b: (0, 0)),
                pl.BlockSpec((F_, C), lambda b: (0, 0)),
            ],
            out_specs=pl.BlockSpec((1, HW, C), lambda b: (b, 0, 0)),
            scratch_shapes=[pltpu.VMEM((H + 2, W + 2, F_), jnp.float32)],
        ),
        compiler_params=pltpu.CompilerParams(
            dimension_semantics=("parallel",),   # B-parallel -> 2 TCs on v7x
        ),
    )(x2, w1, dwk9, w2)
    return out2.reshape(B, H, W, C)


def _reference(x, w1, dwk, w2):
    """Pure-JAX (XLA) reference of the FeedForward forward pass."""
    f32 = jnp.float32
    hp = jax.lax.Precision.HIGHEST
    h = jnp.einsum("bhwc,cf->bhwf", x.astype(f32), w1.astype(f32), precision=hp)
    h = _gelu(h)
    F_ = h.shape[-1]
    k = dwk.astype(f32).reshape(3, 3, 1, F_)       # HWIO, I = C_in/groups = 1
    h = jax.lax.conv_general_dilated(
        h, k, window_strides=(1, 1), padding=((1, 1), (1, 1)),
        dimension_numbers=("NHWC", "HWIO", "NHWC"),
        feature_group_count=F_, precision=hp)
    h = _gelu(h)
    out = jnp.einsum("bhwf,fc->bhwc", h, w2.astype(f32), precision=hp)
    return out.astype(x.dtype)


if __name__ == "__main__":
    key = jax.random.PRNGKey(0)
    kx, k1, kd, k2 = jax.random.split(key, 4)

    B, H, W, C = 2, 16, 16, 4
    mult = 4
    F_ = C * mult

    x = jax.random.normal(kx, (B, H, W, C), dtype=jnp.float32)
    # Conv weights in matmul-friendly layouts (all bias-free, like the module):
    #   torch conv_in.weight  (F, C, 1, 1) -> w1[c, f]      = weight[f, c, 0, 0]
    #   torch dwconv.weight   (F, 1, 3, 3) -> dwk[kh,kw,f]  = weight[f, 0, kh, kw]
    #   torch conv_out.weight (C, F, 1, 1) -> w2[f, c]      = weight[c, f, 0, 0]
    w1 = jax.random.normal(k1, (C, F_), dtype=jnp.float32) * (C ** -0.5)
    dwk = jax.random.normal(kd, (3, 3, F_), dtype=jnp.float32) * (1.0 / 3.0)
    w2 = jax.random.normal(k2, (F_, C), dtype=jnp.float32) * (F_ ** -0.5)

    out = feedforward(x, w1, dwk, w2)
    out = jax.block_until_ready(out)

    ref = _reference(x, w1, dwk, w2)
    assert out.shape == (B, H, W, C)
    err = float(jnp.max(jnp.abs(out - ref)))
    assert err < 2e-3, f"max abs err {err}"

    print("KERNEL_OK")
</pallas_src>

<mosaic_0001>
module attributes {stable_mosaic.version = 11 : i64} {
  func.func @_feedforward_kernel(%arg0: i32, %arg1: memref<1x256x4xf32, #tpu.memory_space<vmem>>, %arg2: memref<4x16xf32, #tpu.memory_space<vmem>>, %arg3: memref<9x16xf32, #tpu.memory_space<vmem>>, %arg4: memref<16x4xf32, #tpu.memory_space<vmem>>, %arg5: memref<1x256x4xf32, #tpu.memory_space<vmem>>, %arg6: memref<18x18x16xf32, #tpu.memory_space<vmem>>) attributes {dimension_semantics = [#tpu.dimension_semantics<parallel>], iteration_bounds = array<i64: 2>, scalar_prefetch = 0 : i64, scratch_operands = 1 : i64, tpu.core_type = #tpu.core_type<tc>, window_params = [{transform_indices = @transform_0, window_bounds = array<i64: 1, 256, 4>}, {pipeline_mode = #tpu.pipeline_mode<synchronous>, transform_indices = @transform_1, window_bounds = array<i64: 4, 16>}, {pipeline_mode = #tpu.pipeline_mode<synchronous>, transform_indices = @transform_2, window_bounds = array<i64: 9, 16>}, {pipeline_mode = #tpu.pipeline_mode<synchronous>, transform_indices = @transform_3, window_bounds = array<i64: 16, 4>}, {transform_indices = @transform_4, window_bounds = array<i64: 1, 256, 4>}]} {
    %c0 = arith.constant 0 : index
    %c0_0 = arith.constant 0 : index
    %c0_1 = arith.constant 0 : index
    %0 = vector.load %arg1[%c0, %c0_0, %c0_1] : memref<1x256x4xf32, #tpu.memory_space<vmem>>, vector<1x256x4xf32>
    %1 = vector.shape_cast %0 : vector<1x256x4xf32> to vector<256x4xf32>
    %c0_2 = arith.constant 0 : index
    %c0_3 = arith.constant 0 : index
    %2 = vector.load %arg2[%c0_2, %c0_3] : memref<4x16xf32, #tpu.memory_space<vmem>>, vector<4x16xf32>
    %cst = arith.constant dense<0.000000e+00> : vector<256x16xf32>
    %3 = tpu.matmul %1, %2, %cst {dimension_numbers = #tpu.dot_dimension_numbers<[1], [0], [0], [1], [0, 0, 1, 1], [], []>} : vector<256x4xf32>, vector<4x16xf32>, vector<256x16xf32> -> vector<256x16xf32>
    %cst_4 = arith.constant 5.000000e-01 : f32
    %4 = vector.broadcast %cst_4 : f32 to vector<256x16xf32>
    %5 = arith.mulf %4, %3 : vector<256x16xf32>
    %6 = arith.mulf %3, %3 : vector<256x16xf32>
    %7 = arith.mulf %6, %3 : vector<256x16xf32>
    %cst_5 = arith.constant 4.471500e-02 : f32
    %8 = vector.broadcast %cst_5 : f32 to vector<256x16xf32>
    %9 = arith.mulf %8, %7 : vector<256x16xf32>
    %10 = arith.addf %3, %9 : vector<256x16xf32>
    %cst_6 = arith.constant 0.797884583 : f32
    %11 = vector.broadcast %cst_6 : f32 to vector<256x16xf32>
    %12 = arith.mulf %11, %10 : vector<256x16xf32>
    %13 = math.tanh %12 : vector<256x16xf32>
    %cst_7 = arith.constant 1.000000e+00 : f32
    %14 = vector.broadcast %cst_7 : f32 to vector<256x16xf32>
    %15 = arith.addf %14, %13 : vector<256x16xf32>
    %16 = arith.mulf %5, %15 : vector<256x16xf32>
    %cst_8 = arith.constant 0.000000e+00 : f32
    %17 = vector.broadcast %cst_8 : f32 to vector<18x18x16xf32>
    %c0_9 = arith.constant 0 : index
    %c0_10 = arith.constant 0 : index
    %c0_11 = arith.constant 0 : index
    %18 = vector.load %arg6[%c0_9, %c0_10, %c0_11] : memref<18x18x16xf32, #tpu.memory_space<vmem>>, vector<18x18x16xf32>
    tpu.vector_store %arg6[%c0_9, %c0_10, %c0_11], %17 {strides = array<i32>} : memref<18x18x16xf32, #tpu.memory_space<vmem>>, vector<18x18x16xf32>,
    %19 = vector.shape_cast %16 : vector<256x16xf32> to vector<16x16x16xf32>
    %c1 = arith.constant 1 : index
    %c1_12 = arith.constant 1 : index
    %c0_13 = arith.constant 0 : index
    %20 = vector.load %arg6[%c1, %c1_12, %c0_13] : memref<18x18x16xf32, #tpu.memory_space<vmem>>, vector<16x16x16xf32>
    tpu.vector_store %arg6[%c1, %c1_12, %c0_13], %19 {strides = array<i32>} : memref<18x18x16xf32, #tpu.memory_space<vmem>>, vector<16x16x16xf32>,
    %cst_14 = arith.constant 0.000000e+00 : f32
    %21 = vector.broadcast %cst_14 : f32 to vector<16x16x16xf32>
    %c0_15 = arith.constant 0 : index
    %c0_16 = arith.constant 0 : index
    %c0_17 = arith.constant 0 : index
    %22 = vector.load %arg6[%c0_15, %c0_16, %c0_17] : memref<18x18x16xf32, #tpu.memory_space<vmem>>, vector<16x16x16xf32>
    %c0_18 = arith.constant 0 : index
    %c0_19 = arith.constant 0 : index
    %23 = vector.load %arg3[%c0_18, %c0_19] : memref<9x16xf32, #tpu.memory_space<vmem>>, vector<1x16xf32>
    %24 = vector.shape_cast %23 : vector<1x16xf32> to vector<16xf32>
    %25 = vector.shape_cast %24 : vector<16xf32> to vector<1x1x16xf32>
    %26 = vector.broadcast %25 : vector<1x1x16xf32> to vector<16x16x16xf32>
    %27 = arith.mulf %22, %26 : vector<16x16x16xf32>
    %28 = arith.addf %21, %27 : vector<16x16x16xf32>
    %c0_20 = arith.constant 0 : index
    %c1_21 = arith.constant 1 : index
    %c0_22 = arith.constant 0 : index
    %29 = vector.load %arg6[%c0_20, %c1_21, %c0_22] : memref<18x18x16xf32, #tpu.memory_space<vmem>>, vector<16x16x16xf32>
    %c1_23 = arith.constant 1 : index
    %c0_24 = arith.constant 0 : index
    %30 = vector.load %arg3[%c1_23, %c0_24] : memref<9x16xf32, #tpu.memory_space<vmem>>, vector<1x16xf32>
    %31 = vector.shape_cast %30 : vector<1x16xf32> to vector<16xf32>
    %32 = vector.shape_cast %31 : vector<16xf32> to vector<1x1x16xf32>
    %33 = vector.broadcast %32 : vector<1x1x16xf32> to vector<16x16x16xf32>
    %34 = arith.mulf %29, %33 : vector<16x16x16xf32>
    %35 = arith.addf %28, %34 : vector<16x16x16xf32>
    %c0_25 = arith.constant 0 : index
    %c2 = arith.constant 2 : index
    %c0_26 = arith.constant 0 : index
    %36 = vector.load %arg6[%c0_25, %c2, %c0_26] : memref<18x18x16xf32, #tpu.memory_space<vmem>>, vector<16x16x16xf32>
    %c2_27 = arith.constant 2 : index
    %c0_28 = arith.constant 0 : index
    %37 = vector.load %arg3[%c2_27, %c0_28] : memref<9x16xf32, #tpu.memory_space<vmem>>, vector<1x16xf32>
    %38 = vector.shape_cast %37 : vector<1x16xf32> to vector<16xf32>
    %39 = vector.shape_cast %38 : vector<16xf32> to vector<1x1x16xf32>
    %40 = vector.broadcast %39 : vector<1x1x16xf32> to vector<16x16x16xf32>
    %41 = arith.mulf %36, %40 : vector<16x16x16xf32>
    %42 = arith.addf %35, %41 : vector<16x16x16xf32>
    %c1_29 = arith.constant 1 : index
    %c0_30 = arith.constant 0 : index
    %c0_31 = arith.constant 0 : index
    %43 = vector.load %arg6[%c1_29, %c0_30, %c0_31] : memref<18x18x16xf32, #tpu.memory_space<vmem>>, vector<16x16x16xf32>
    %c3 = arith.constant 3 : index
    %c0_32 = arith.constant 0 : index
    %44 = vector.load %arg3[%c3, %c0_32] : memref<9x16xf32, #tpu.memory_space<vmem>>, vector<1x16xf32>
    %45 = vector.shape_cast %44 : vector<1x16xf32> to vector<16xf32>
    %46 = vector.shape_cast %45 : vector<16xf32> to vector<1x1x16xf32>
    %47 = vector.broadcast %46 : vector<1x1x16xf32> to vector<16x16x16xf32>
    %48 = arith.mulf %43, %47 : vector<16x16x16xf32>
    %49 = arith.addf %42, %48 : vector<16x16x16xf32>
    %c1_33 = arith.constant 1 : index
    %c1_34 = arith.constant 1 : index
    %c0_35 = arith.constant 0 : index
    %50 = vector.load %arg6[%c1_33, %c1_34, %c0_35] : memref<18x18x16xf32, #tpu.memory_space<vmem>>, vector<16x16x16xf32>
    %c4 = arith.constant 4 : index
    %c0_36 = arith.constant 0 : index
    %51 = vector.load %arg3[%c4, %c0_36] : memref<9x16xf32, #tpu.memory_space<vmem>>, vector<1x16xf32>
    %52 = vector.shape_cast %51 : vector<1x16xf32> to vector<16xf32>
    %53 = vector.shape_cast %52 : vector<16xf32> to vector<1x1x16xf32>
    %54 = vector.broadcast %53 : vector<1x1x16xf32> to vector<16x16x16xf32>
    %55 = arith.mulf %50, %54 : vector<16x16x16xf32>
    %56 = arith.addf %49, %55 : vector<16x16x16xf32>
    %c1_37 = arith.constant 1 : index
    %c2_38 = arith.constant 2 : index
    %c0_39 = arith.constant 0 : index
    %57 = vector.load %arg6[%c1_37, %c2_38, %c0_39] : memref<18x18x16xf32, #tpu.memory_space<vmem>>, vector<16x16x16xf32>
    %c5 = arith.constant 5 : index
    %c0_40 = arith.constant 0 : index
    %58 = vector.load %arg3[%c5, %c0_40] : memref<9x16xf32, #tpu.memory_space<vmem>>, vector<1x16xf32>
    %59 = vector.shape_cast %58 : vector<1x16xf32> to vector<16xf32>
    %60 = vector.shape_cast %59 : vector<16xf32> to vector<1x1x16xf32>
    %61 = vector.broadcast %60 : vector<1x1x16xf32> to vector<16x16x16xf32>
    %62 = arith.mulf %57, %61 : vector<16x16x16xf32>
    %63 = arith.addf %56, %62 : vector<16x16x16xf32>
    %c2_41 = arith.constant 2 : index
    %c0_42 = arith.constant 0 : index
    %c0_43 = arith.constant 0 : index
    %64 = vector.load %arg6[%c2_41, %c0_42, %c0_43] : memref<18x18x16xf32, #tpu.memory_space<vmem>>, vector<16x16x16xf32>
    %c6 = arith.constant 6 : index
    %c0_44 = arith.constant 0 : index
    %65 = vector.load %arg3[%c6, %c0_44] : memref<9x16xf32, #tpu.memory_space<vmem>>, vector<1x16xf32>
    %66 = vector.shape_cast %65 : vector<1x16xf32> to vector<16xf32>
    %67 = vector.shape_cast %66 : vector<16xf32> to vector<1x1x16xf32>
    %68 = vector.broadcast %67 : vector<1x1x16xf32> to vector<16x16x16xf32>
    %69 = arith.mulf %64, %68 : vector<16x16x16xf32>
    %70 = arith.addf %63, %69 : vector<16x16x16xf32>
    %c2_45 = arith.constant 2 : index
    %c1_46 = arith.constant 1 : index
    %c0_47 = arith.constant 0 : index
    %71 = vector.load %arg6[%c2_45, %c1_46, %c0_47] : memref<18x18x16xf32, #tpu.memory_space<vmem>>, vector<16x16x16xf32>
    %c7 = arith.constant 7 : index
    %c0_48 = arith.constant 0 : index
    %72 = vector.load %arg3[%c7, %c0_48] : memref<9x16xf32, #tpu.memory_space<vmem>>, vector<1x16xf32>
    %73 = vector.shape_cast %72 : vector<1x16xf32> to vector<16xf32>
    %74 = vector.shape_cast %73 : vector<16xf32> to vector<1x1x16xf32>
    %75 = vector.broadcast %74 : vector<1x1x16xf32> to vector<16x16x16xf32>
    %76 = arith.mulf %71, %75 : vector<16x16x16xf32>
    %77 = arith.addf %70, %76 : vector<16x16x16xf32>
    %c2_49 = arith.constant 2 : index
    %c2_50 = arith.constant 2 : index
    %c0_51 = arith.constant 0 : index
    %78 = vector.load %arg6[%c2_49, %c2_50, %c0_51] : memref<18x18x16xf32, #tpu.memory_space<vmem>>, vector<16x16x16xf32>
    %c8 = arith.constant 8 : index
    %c0_52 = arith.constant 0 : index
    %79 = vector.load %arg3[%c8, %c0_52] : memref<9x16xf32, #tpu.memory_space<vmem>>, vector<1x16xf32>
    %80 = vector.shape_cast %79 : vector<1x16xf32> to vector<16xf32>
    %81 = vector.shape_cast %80 : vector<16xf32> to vector<1x1x16xf32>
    %82 = vector.broadcast %81 : vector<1x1x16xf32> to vector<16x16x16xf32>
    %83 = arith.mulf %78, %82 : vector<16x16x16xf32>
    %84 = arith.addf %77, %83 : vector<16x16x16xf32>
    %cst_53 = arith.constant 5.000000e-01 : f32
    %85 = vector.broadcast %cst_53 : f32 to vector<16x16x16xf32>
    %86 = arith.mulf %85, %84 : vector<16x16x16xf32>
    %87 = arith.mulf %84, %84 : vector<16x16x16xf32>
    %88 = arith.mulf %87, %84 : vector<16x16x16xf32>
    %cst_54 = arith.constant 4.471500e-02 : f32
    %89 = vector.broadcast %cst_54 : f32 to vector<16x16x16xf32>
    %90 = arith.mulf %89, %88 : vector<16x16x16xf32>
    %91 = arith.addf %84, %90 : vector<16x16x16xf32>
    %cst_55 = arith.constant 0.797884583 : f32
    %92 = vector.broadcast %cst_55 : f32 to vector<16x16x16xf32>
    %93 = arith.mulf %92, %91 : vector<16x16x16xf32>
    %94 = math.tanh %93 : vector<16x16x16xf32>
    %cst_56 = arith.constant 1.000000e+00 : f32
    %95 = vector.broadcast %cst_56 : f32 to vector<16x16x16xf32>
    %96 = arith.addf %95, %94 : vector<16x16x16xf32>
    %97 = arith.mulf %86, %96 : vector<16x16x16xf32>
    %98 = vector.shape_cast %97 : vector<16x16x16xf32> to vector<256x16xf32>
    %c0_57 = arith.constant 0 : index
    %c0_58 = arith.constant 0 : index
    %99 = vector.load %arg4[%c0_57, %c0_58] : memref<16x4xf32, #tpu.memory_space<vmem>>, vector<16x4xf32>
    %cst_59 = arith.constant dense<0.000000e+00> : vector<256x4xf32>
    %100 = tpu.matmul %98, %99, %cst_59 {dimension_numbers = #tpu.dot_dimension_numbers<[1], [0], [0], [1], [0, 0, 1, 1], [], []>} : vector<256x16xf32>, vector<16x4xf32>, vector<256x4xf32> -> vector<256x4xf32>
    %c0_60 = arith.constant 0 : index
    %c0_61 = arith.constant 0 : index
    %c0_62 = arith.constant 0 : index
    %101 = vector.load %arg5[%c0_60, %c0_61, %c0_62] : memref<1x256x4xf32, #tpu.memory_space<vmem>>, vector<1x256x4xf32>
    %102 = vector.shape_cast %101 : vector<1x256x4xf32> to vector<256x4xf32>
    %103 = vector.shape_cast %100 : vector<256x4xf32> to vector<1x256x4xf32>
    tpu.vector_store %arg5[%c0_60, %c0_61, %c0_62], %103 {strides = array<i32>} : memref<1x256x4xf32, #tpu.memory_space<vmem>>, vector<1x256x4xf32>,
    return
  }
  func.func @transform_0(%arg0: i32) -> (i32, i32, i32) {
    %c0_i32 = arith.constant 0 : i32
    %c0_i32_0 = arith.constant 0 : i32
    %c0_i32_1 = arith.constant 0 : i32
    return %arg0, %c0_i32, %c0_i32_0 : i32, i32, i32
  }
  func.func @transform_1(%arg0: i32) -> (i32, i32) {
    %c0_i32 = arith.constant 0 : i32
    %c0_i32_0 = arith.constant 0 : i32
    %c0_i32_1 = arith.constant 0 : i32
    return %c0_i32, %c0_i32_0 : i32, i32
  }
  func.func @transform_2(%arg0: i32) -> (i32, i32) {
    %c0_i32 = arith.constant 0 : i32
    %c0_i32_0 = arith.constant 0 : i32
    %c0_i32_1 = arith.constant 0 : i32
    return %c0_i32, %c0_i32_0 : i32, i32
  }
  func.func @transform_3(%arg0: i32) -> (i32, i32) {
    %c0_i32 = arith.constant 0 : i32
    %c0_i32_0 = arith.constant 0 : i32
    %c0_i32_1 = arith.constant 0 : i32
    return %c0_i32, %c0_i32_0 : i32, i32
  }
  func.func @transform_4(%arg0: i32) -> (i32, i32, i32) {
    %c0_i32 = arith.constant 0 : i32
    %c0_i32_0 = arith.constant 0 : i32
    %c0_i32_1 = arith.constant 0 : i32
    return %arg0, %c0_i32, %c0_i32_0 : i32, i32, i32
  }
}

</mosaic_0001>

<llo_original>
// kernel: feedforward.1
$region0: #{feedforward.1}
  #allocation0 [shape = 'u32[]', space=smem, size = 0x4, offset = 0x4, fixed_abs, tag = 'smem constant byte address 0x4 - core index']
  #allocation1 [shape = 'u32[72,128]{1,0:T(1,128)}', space=vmem, size = 0x9000, scoped, tag = 'internal scratch']
  #allocation2 [shape = 'f32[18,18,16]{2,1,0:T(8,128)}', space=vmem, size = 0x36000, scoped, tag = 'scratch operand']
  %s0 = inlined_call_operand.vmem [shape: f32[2,256,4], index: 0, kind: input, shape index: {}]
  %s1 = inlined_call_operand.vmem [shape: f32[4,16], index: 1, kind: input, shape index: {}]
  %s2 = inlined_call_operand.vmem [shape: f32[9,16], index: 2, kind: input, shape index: {}]
  %s3 = inlined_call_operand.vmem [shape: f32[16,4], index: 3, kind: input, shape index: {}]
  %s4 = inlined_call_operand.vmem [shape: f32[2,256,4], index: 4, kind: output, shape index: {}]
  %s5 = sld [smem:[#allocation0]]
  $region49: #{feedforward.1} parent=0
    _
  %s7 = ssub.s32 1, %s5
  %s8 = scalar_select 0, %s7, %s5
  loop: start=0, step=1, limit=4
  $region2: #{feedforward.1} parent=0 // loop_pre_header
    _
  $region3: #{feedforward.1} parent=0 // loop_header
    %s10 = sphi 0, %s14
    %p11 = scmp.ge.s32.totalorder %s10, 4
    %s20 = sphi 0, %s22
    %s23 = sphi 0, %s20
    %s24 = sphi 0, %s23
    %s40 = sphi 0, %s24
    %s44 = sphi 0, %s44
    %s46 = sphi 0, %s44
    %s47 = sphi 0, %s46
    %s61 = sphi 0, %s47
    %s65 = sphi 0, %s65
    %s67 = sphi 0, %s65
    %s68 = sphi 0, %s67
    %s82 = sphi 0, %s68
    %s86 = sphi 0, %s86
    %s88 = sphi 0, %s86
    %s89 = sphi 0, %s88
    %s103 = sphi 0, %s89
    %s109 = sphi 0, %s111
    %s112 = sphi 0, %s109
    %s113 = sphi 0, %s112
    %s129 = sphi 0, %s113
  $region4: #{feedforward.1} parent=0 // loop_header_branch
    %13 = sbr.rel (%p11) target = $region8
  $region5: #{feedforward.1} parent=0 // loop_body
    %s15 = ssub.s32 %s10, 1
    %s16 = ssub.s32 %s10, 2
    %s17 = sadd.s32 %s10, 1
    %s18 = ssub.s32 %s10, %s17
    %p19 = scmp.eq.s32.totalorder %s18, 0
    %s21 = sadd.s32 %s20, 1
    %s22 = scalar_select %p19, %s20, %s21
    %p25 = pneg %p19
    %p26 = scmp.eq.s32.totalorder %s10, 1
    %p27 = por %p25, %p26
    %p28 = scmp.ne.s32.totalorder %s20, %s23
    %p29 = scmp.eq.s32.totalorder %s10, 0
    %p30 = por %p28, %p29
    %p31 = scmp.ne.s32.totalorder %s20, %s23
    %p32 = scmp.eq.s32.totalorder %s15, 1
    %p33 = por %p31, %p32
    %p34 = scmp.ne.s32.totalorder %s23, %s24
    %p35 = scmp.eq.s32.totalorder %s15, 0
    %p36 = por %p34, %p35
    %p37 = scmp.ne.s32.totalorder %s23, %s24
    %p38 = scmp.eq.s32.totalorder %s16, 1
    %p39 = por %p37, %p38
    %p41 = scmp.ne.s32.totalorder %s24, %s40
    %p42 = scmp.eq.s32.totalorder %s16, 0
    %p43 = por %p41, %p42
    %s45 = sadd.s32 %s44, 1
    %p48 = scmp.eq.s32.totalorder %s10, 1
    %p49 = scmp.ne.s32.totalorder %s44, %s46
    %p50 = scmp.eq.s32.totalorder %s10, 0
    %p51 = por %p49, %p50
    %p52 = scmp.ne.s32.totalorder %s44, %s46
    %p53 = scmp.eq.s32.totalorder %s15, 1
    %p54 = por %p52, %p53
    %p55 = scmp.ne.s32.totalorder %s46, %s47
    %p56 = scmp.eq.s32.totalorder %s15, 0
    %p57 = por %p55, %p56
    %p58 = scmp.ne.s32.totalorder %s46, %s47
    %p59 = scmp.eq.s32.totalorder %s16, 1
    %p60 = por %p58, %p59
    %p62 = scmp.ne.s32.totalorder %s47, %s61
    %p63 = scmp.eq.s32.totalorder %s16, 0
    %p64 = por %p62, %p63
    %s66 = sadd.s32 %s65, 1
    %p69 = scmp.eq.s32.totalorder %s10, 1
    %p70 = scmp.ne.s32.totalorder %s65, %s67
    %p71 = scmp.eq.s32.totalorder %s10, 0
    %p72 = por %p70, %p71
    %p73 = scmp.ne.s32.totalorder %s65, %s67
    %p74 = scmp.eq.s32.totalorder %s15, 1
    %p75 = por %p73, %p74
    %p76 = scmp.ne.s32.totalorder %s67, %s68
    %p77 = scmp.eq.s32.totalorder %s15, 0
    %p78 = por %p76, %p77
    %p79 = scmp.ne.s32.totalorder %s67, %s68
    %p80 = scmp.eq.s32.totalorder %s16, 1
    %p81 = por %p79, %p80
    %p83 = scmp.ne.s32.totalorder %s68, %s82
    %p84 = scmp.eq.s32.totalorder %s16, 0
    %p85 = por %p83, %p84
    %s87 = sadd.s32 %s86, 1
    %p90 = scmp.eq.s32.totalorder %s10, 1
    %p91 = scmp.ne.s32.totalorder %s86, %s88
    %p92 = scmp.eq.s32.totalorder %s10, 0
    %p93 = por %p91, %p92
    %p94 = scmp.ne.s32.totalorder %s86, %s88
    %p95 = scmp.eq.s32.totalorder %s15, 1
    %p96 = por %p94, %p95
    %p97 = scmp.ne.s32.totalorder %s88, %s89
    %p98 = scmp.eq.s32.totalorder %s15, 0
    %p99 = por %p97, %p98
    %p100 = scmp.ne.s32.totalorder %s88, %s89
    %p101 = scmp.eq.s32.totalorder %s16, 1
    %p102 = por %p100, %p101
    %p104 = scmp.ne.s32.totalorder %s89, %s103
    %p105 = scmp.eq.s32.totalorder %s16, 0
    %p106 = por %p104, %p105
    %s107 = ssub.s32 %s10, %s17
    %p108 = scmp.eq.s32.totalorder %s107, 0
    %s110 = sadd.s32 %s109, 1
    %s111 = scalar_select %p108, %s109, %s110
    %p114 = pneg %p108
    %p115 = scmp.eq.s32.totalorder %s10, 1
    %p116 = por %p114, %p115
    %p117 = scmp.ne.s32.totalorder %s109, %s112
    %p118 = scmp.eq.s32.totalorder %s10, 0
    %p119 = por %p117, %p118
    %p120 = scmp.ne.s32.totalorder %s109, %s112
    %p121 = scmp.eq.s32.totalorder %s15, 1
    %p122 = por %p120, %p121
    %p123 = scmp.ne.s32.totalorder %s112, %s113
    %p124 = scmp.eq.s32.totalorder %s15, 0
    %p125 = por %p123, %p124
    %p126 = scmp.ne.s32.totalorder %s112, %s113
    %p127 = scmp.eq.s32.totalorder %s16, 1
    %p128 = por %p126, %p127
    %p130 = scmp.ne.s32.totalorder %s113, %s129
    %p131 = scmp.eq.s32.totalorder %s16, 0
    %p132 = por %p130, %p131
    %p133 = scmp.le.s32.totalorder 1, %s10
    %p134 = scmp.lt.s32.totalorder %s10, 3
    %p135 = pnand %p133, %p134
    %p136 = pneg %p135
    // Predicated region
    $region9: #{feedforward.1} parent=5 // pred_check
      _
    $region10: #{feedforward.1} parent=5 // pred_check_branch
      %138 = sbr.rel (%p135) target = $region12
    $region11: #{feedforward.1} parent=5 // pred_region
      %s139 = ssub.s32 %s10, 1
      // Predicated region
      $region13: #{feedforward.1} parent=11 // pred_check
        %p140 = pneg %p57
      $region14: #{feedforward.1} parent=11 // pred_check_branch
        %142 = sbr.rel (%p140) target = $region16
      $region15: #{feedforward.1} parent=11 // pred_region
        _
      $region16: #{feedforward.1} parent=11 // pred_fallthru
        _
      // Predicated region
      $region17: #{feedforward.1} parent=11 // pred_check
        %p143 = pneg %p78
      $region18: #{feedforward.1} parent=11 // pred_check_branch
        %145 = sbr.rel (%p143) target = $region20
      $region19: #{feedforward.1} parent=11 // pred_region
        _
      $region20: #{feedforward.1} parent=11 // pred_fallthru
        _
      // Predicated region
      $region21: #{feedforward.1} parent=11 // pred_check
        %p146 = pneg %p99
      $region22: #{feedforward.1} parent=11 // pred_check_branch
        %148 = sbr.rel (%p146) target = $region24
      $region23: #{feedforward.1} parent=11 // pred_region
        _
      $region24: #{feedforward.1} parent=11 // pred_fallthru
        _
    $region12: #{feedforward.1} parent=5 // pred_fallthru
      _
    %p149 = scmp.lt.s32.totalorder %s10, 2
    // Predicated region
    $region25: #{feedforward.1} parent=5 // pred_check
      %p150 = pneg %p149
    $region26: #{feedforward.1} parent=5 // pred_check_branch
      %152 = sbr.rel (%p150) target = $region28
    $region27: #{feedforward.1} parent=5 // pred_region
      // Predicated region
      $region29: #{feedforward.1} parent=27 // pred_check
        %p153 = pneg %p30
      $region30: #{feedforward.1} parent=27 // pred_check_branch
        %155 = sbr.rel (%p153) target = $region32
      $region31: #{feedforward.1} parent=27 // pred_region
        %p156 = scmp.lt.s32.totalorder %s10, 1
        %s157 = scalar_select %p156, %s10, 1
        %s158 = smul.addr %s157, 32
        %s159 = smul.addr %s158, 8
        %s160 = scalar_lea.vmem %s0, %s159
      $region32: #{feedforward.1} parent=27 // pred_fallthru
        _
    $region28: #{feedforward.1} parent=5 // pred_fallthru
      _
    %p161 = scmp.le.s32.totalorder 1, %s10
    %p162 = scmp.lt.s32.totalorder %s10, 3
    %p163 = pnand %p161, %p162
    %p164 = pneg %p163
    // Predicated region
    $region33: #{feedforward.1} parent=5 // pred_check
      _
    $region34: #{feedforward.1} parent=5 // pred_check_branch
      %166 = sbr.rel (%p163) target = $region36
    $region35: #{feedforward.1} parent=5 // pred_region
      %s167 = ssub.s32 %s10, 1
      %p168 = scmp.lt.s32.totalorder %s15, 1
      %s169 = scalar_select %p168, %s15, 1
      %s170 = smul.addr %s169, 32
      %s171 = smul.addr %s170, 8
      %s172 = scalar_lea.vmem %s0, %s171
      %p173 = pneg %p36
      %p174 = pneg %p33
      %p175 = pneg %p57
      %p176 = pneg %p54
      %p177 = pneg %p78
      %p178 = pneg %p75
      %p179 = pneg %p99
      %p180 = pneg %p96
      %p181 = pneg %p125
      %p182 = pneg %p122
      %p183 = scmp.lt.s32.totalorder %s15, 1
      %s184 = scalar_select %p183, %s15, 1
      %s185 = smul.addr %s184, 32
      %s186 = smul.addr %s185, 8
      %s187 = scalar_lea.vmem %s4, %s186
      %p188 = scmp.lt.s32.totalorder %s15, 1
      %s189 = scalar_select %p188, %s15, 1
      %s190 = smul.addr %s189, 32
      %s191 = smul.addr %s190, 8
      %s192 = scalar_lea.vmem %s0, %s191
      %p193 = scmp.lt.s32.totalorder %s15, 1
      %s194 = scalar_select %p193, %s15, 1
      %s195 = smul.addr %s194, 32
      %s196 = smul.addr %s195, 8
      %s197 = scalar_lea.vmem %s4, %s196
      %v198 = vld [vmem:[%s192] sm:$0xff]
      %v199 = vld [vmem:[%s192 + $0x8] sm:$0xff]
      %v200 = vld [vmem:[%s192 + $0x10] sm:$0xff]
      %v201 = vld [vmem:[%s192 + $0x18] sm:$0xff]
      %v202 = vld [vmem:[%s192 + $0x20] sm:$0xff]
      %v203 = vld [vmem:[%s192 + $0x28] sm:$0xff]
      %v204 = vld [vmem:[%s192 + $0x30] sm:$0xff]
      %v205 = vld [vmem:[%s192 + $0x38] sm:$0xff]
      %v206 = vld [vmem:[%s192 + $0x40] sm:$0xff]
      %v207 = vld [vmem:[%s192 + $0x48] sm:$0xff]
      %v208 = vld [vmem:[%s192 + $0x50] sm:$0xff]
      %v209 = vld [vmem:[%s192 + $0x58] sm:$0xff]
      %v210 = vld [vmem:[%s192 + $0x60] sm:$0xff]
      %v211 = vld [vmem:[%s192 + $0x68] sm:$0xff]
      %v212 = vld [vmem:[%s192 + $0x70] sm:$0xff]
      %v213 = vld [vmem:[%s192 + $0x78] sm:$0xff]
      %v214 = vld [vmem:[%s192 + $0x80] sm:$0xff]
      %v215 = vld [vmem:[%s192 + $0x88] sm:$0xff]
      %v216 = vld [vmem:[%s192 + $0x90] sm:$0xff]
      %v217 = vld [vmem:[%s192 + $0x98] sm:$0xff]
      %v218 = vld [vmem:[%s192 + $0xa0] sm:$0xff]
      %v219 = vld [vmem:[%s192 + $0xa8] sm:$0xff]
      %v220 = vld [vmem:[%s192 + $0xb0] sm:$0xff]
      %v221 = vld [vmem:[%s192 + $0xb8] sm:$0xff]
      %v222 = vld [vmem:[%s192 + $0xc0] sm:$0xff]
      %v223 = vld [vmem:[%s192 + $0xc8] sm:$0xff]
      %v224 = vld [vmem:[%s192 + $0xd0] sm:$0xff]
      %v225 = vld [vmem:[%s192 + $0xd8] sm:$0xff]
      %v226 = vld [vmem:[%s192 + $0xe0] sm:$0xff]
      %v227 = vld [vmem:[%s192 + $0xe8] sm:$0xff]
      %v228 = vld [vmem:[%s192 + $0xf0] sm:$0xff]
      %v229 = vld [vmem:[%s192 + $0xf8] sm:$0xff]
      %v230 = vld [vmem:[%s1] sm:$0xf]
      %vm231 = vcmask 31744
      %v233 = vsel %vm231, %v198, 0
      %v236 = vsel %vm231, %v199, 0
      %v239 = vsel %vm231, %v200, 0
      %v242 = vsel %vm231, %v201, 0
      %v245 = vsel %vm231, %v202, 0
      %v248 = vsel %vm231, %v203, 0
      %v251 = vsel %vm231, %v204, 0
      %v254 = vsel %vm231, %v205, 0
      %v257 = vsel %vm231, %v206, 0
      %v260 = vsel %vm231, %v207, 0
      %v263 = vsel %vm231, %v208, 0
      %v266 = vsel %vm231, %v209, 0
      %v269 = vsel %vm231, %v210, 0
      %v272 = vsel %vm231, %v211, 0
      %v275 = vsel %vm231, %v212, 0
      %v278 = vsel %vm231, %v213, 0
      %v281 = vsel %vm231, %v214, 0
      %v284 = vsel %vm231, %v215, 0
      %v287 = vsel %vm231, %v216, 0
      %v290 = vsel %vm231, %v217, 0
      %v293 = vsel %vm231, %v218, 0
      %v296 = vsel %vm231, %v219, 0
      %v299 = vsel %vm231, %v220, 0
      %v302 = vsel %vm231, %v221, 0
      %v305 = vsel %vm231, %v222, 0
      %v308 = vsel %vm231, %v223, 0
      %v311 = vsel %vm231, %v224, 0
      %v314 = vsel %vm231, %v225, 0
      %v317 = vsel %vm231, %v226, 0
      %v320 = vsel %vm231, %v227, 0
      %v323 = vsel %vm231, %v228, 0
      %v326 = vsel %vm231, %v229, 0
      %vm328 = vcmask 1043456
      %v330 = vsel %vm328, %v230, 0
      %332 = vmatpush.msra.mxu0 0.0
      %333 = vmatpush.msra.mxu0 0.0
      %334 = vmatpush.msra.mxu0 0.0
      %335 = vmatpush.msra.mxu0 0.0
      %336 = vmatpush.msra.mxu0 0.0
      %337 = vmatpush.msra.mxu0 0.0
      %338 = vmatpush.msra.mxu0 0.0
      %339 = vmatpush.msra.mxu0 0.0
      %340 = vmatpush.msra.mxu0 0.0
      %341 = vmatpush.msra.mxu0 0.0
      %342 = vmatpush.msra.mxu0 0.0
      %343 = vmatpush.msra.mxu0 0.0
      %344 = vmatpush.msra.mxu0 0.0
      %345 = vmatpush.msra.mxu0 0.0
      %346 = vmatpush.msra.mxu0 0.0
      %347 = vmatpush.msra.mxu0 %v330
      %348 = vmatmul.f32.gmra.mxu0 %v233
      %v349 = vpop.f32.mrf.mxu0
      %v350 = vadd.f32 0.0, %v349
      %351 = vmatmul.f32.gmra.mxu0 %v236
      %v352 = vpop.f32.mrf.mxu0
      %v353 = vadd.f32 0.0, %v352
      %354 = vmatmul.f32.gmra.mxu0 %v239
      %v355 = vpop.f32.mrf.mxu0
      %v356 = vadd.f32 0.0, %v355
      %357 = vmatmul.f32.gmra.mxu0 %v242
      %v358 = vpop.f32.mrf.mxu0
      %v359 = vadd.f32 0.0, %v358
      %360 = vmatmul.f32.gmra.mxu0 %v245
      %v361 = vpop.f32.mrf.mxu0
      %v362 = vadd.f32 0.0, %v361
      %363 = vmatmul.f32.gmra.mxu0 %v248
      %v364 = vpop.f32.mrf.mxu0
      %v365 = vadd.f32 0.0, %v364
      %366 = vmatmul.f32.gmra.mxu0 %v251
      %v367 = vpop.f32.mrf.mxu0
      %v368 = vadd.f32 0.0, %v367
      %369 = vmatmul.f32.gmra.mxu0 %v254
      %v370 = vpop.f32.mrf.mxu0
      %v371 = vadd.f32 0.0, %v370
      %372 = vmatmul.f32.gmra.mxu0 %v257
      %v373 = vpop.f32.mrf.mxu0
      %v374 = vadd.f32 0.0, %v373
      %375 = vmatmul.f32.gmra.mxu0 %v260
      %v376 = vpop.f32.mrf.mxu0
      %v377 = vadd.f32 0.0, %v376
      %378 = vmatmul.f32.gmra.mxu0 %v263
      %v379 = vpop.f32.mrf.mxu0
      %v380 = vadd.f32 0.0, %v379
      %381 = vmatmul.f32.gmra.mxu0 %v266
      %v382 = vpop.f32.mrf.mxu0
      %v383 = vadd.f32 0.0, %v382
      %384 = vmatmul.f32.gmra.mxu0 %v269
      %v385 = vpop.f32.mrf.mxu0
      %v386 = vadd.f32 0.0, %v385
      %387 = vmatmul.f32.gmra.mxu0 %v272
      %v388 = vpop.f32.mrf.mxu0
      %v389 = vadd.f32 0.0, %v388
      %390 = vmatmul.f32.gmra.mxu0 %v275
      %v391 = vpop.f32.mrf.mxu0
      %v392 = vadd.f32 0.0, %v391
      %393 = vmatmul.f32.gmra.mxu0 %v278
      %v394 = vpop.f32.mrf.mxu0
      %v395 = vadd.f32 0.0, %v394
      %396 = vmatmul.f32.gmra.mxu0 %v281
      %v397 = vpop.f32.mrf.mxu0
      %v398 = vadd.f32 0.0, %v397
      %399 = vmatmul.f32.gmra.mxu0 %v284
      %v400 = vpop.f32.mrf.mxu0
      %v401 = vadd.f32 0.0, %v400
      %402 = vmatmul.f32.gmra.mxu0 %v287
      %v403 = vpop.f32.mrf.mxu0
      %v404 = vadd.f32 0.0, %v403
      %405 = vmatmul.f32.gmra.mxu0 %v290
      %v406 = vpop.f32.mrf.mxu0
      %v407 = vadd.f32 0.0, %v406
      %408 = vmatmul.f32.gmra.mxu0 %v293
      %v409 = vpop.f32.mrf.mxu0
      %v410 = vadd.f32 0.0, %v409
      %411 = vmatmul.f32.gmra.mxu0 %v296
      %v412 = vpop.f32.mrf.mxu0
      %v413 = vadd.f32 0.0, %v412
      %414 = vmatmul.f32.gmra.mxu0 %v299
      %v415 = vpop.f32.mrf.mxu0
      %v416 = vadd.f32 0.0, %v415
      %417 = vmatmul.f32.gmra.mxu0 %v302
      %v418 = vpop.f32.mrf.mxu0
      %v419 = vadd.f32 0.0, %v418
      %420 = vmatmul.f32.gmra.mxu0 %v305
      %v421 = vpop.f32.mrf.mxu0
      %v422 = vadd.f32 0.0, %v421
      %423 = vmatmul.f32.gmra.mxu0 %v308
      %v424 = vpop.f32.mrf.mxu0
      %v425 = vadd.f32 0.0, %v424
      %426 = vmatmul.f32.gmra.mxu0 %v311
      %v427 = vpop.f32.mrf.mxu0
      %v428 = vadd.f32 0.0, %v427
      %429 = vmatmul.f32.gmra.mxu0 %v314
      %v430 = vpop.f32.mrf.mxu0
      %v431 = vadd.f32 0.0, %v430
      %432 = vmatmul.f32.gmra.mxu0 %v317
      %v433 = vpop.f32.mrf.mxu0
      %v434 = vadd.f32 0.0, %v433
      %435 = vmatmul.f32.gmra.mxu0 %v320
      %v436 = vpop.f32.mrf.mxu0
      %v437 = vadd.f32 0.0, %v436
      %438 = vmatmul.f32.gmra.mxu0 %v323
      %v439 = vpop.f32.mrf.mxu0
      %v440 = vadd.f32 0.0, %v439
      %441 = vmatmul.f32.gmra.mxu0 %v326
      %v442 = vpop.f32.mrf.mxu0
      %v443 = vadd.f32 0.0, %v442
      %444 = vdwg.mxu0
      %v445 = vmul.f32 %v350, 0.5
      %v446 = vmul.f32 %v353, 0.5
      %v447 = vmul.f32 %v356, 0.5
      %v448 = vmul.f32 %v359, 0.5
      %v449 = vmul.f32 %v362, 0.5
      %v450 = vmul.f32 %v365, 0.5
      %v451 = vmul.f32 %v368, 0.5
      %v452 = vmul.f32 %v371, 0.5
      %v453 = vmul.f32 %v374, 0.5
      %v454 = vmul.f32 %v377, 0.5
      %v455 = vmul.f32 %v380, 0.5
      %v456 = vmul.f32 %v383, 0.5
      %v457 = vmul.f32 %v386, 0.5
      %v458 = vmul.f32 %v389, 0.5
      %v459 = vmul.f32 %v392, 0.5
      %v460 = vmul.f32 %v395, 0.5
      %v461 = vmul.f32 %v398, 0.5
      %v462 = vmul.f32 %v401, 0.5
      %v463 = vmul.f32 %v404, 0.5
      %v464 = vmul.f32 %v407, 0.5
      %v465 = vmul.f32 %v410, 0.5
      %v466 = vmul.f32 %v413, 0.5
      %v467 = vmul.f32 %v416, 0.5
      %v468 = vmul.f32 %v419, 0.5
      %v469 = vmul.f32 %v422, 0.5
      %v470 = vmul.f32 %v425, 0.5
      %v471 = vmul.f32 %v428, 0.5
      %v472 = vmul.f32 %v431, 0.5
      %v473 = vmul.f32 %v434, 0.5
      %v474 = vmul.f32 %v437, 0.5
      %v475 = vmul.f32 %v440, 0.5
      %v476 = vmul.f32 %v443, 0.5
      %v477 = vmul.f32 %v350, %v350
      %v478 = vmul.f32 %v353, %v353
      %v479 = vmul.f32 %v356, %v356
      %v480 = vmul.f32 %v359, %v359
      %v481 = vmul.f32 %v362, %v362
      %v482 = vmul.f32 %v365, %v365
      %v483 = vmul.f32 %v368, %v368
      %v484 = vmul.f32 %v371, %v371
      %v485 = vmul.f32 %v374, %v374
      %v486 = vmul.f32 %v377, %v377
      %v487 = vmul.f32 %v380, %v380
      %v488 = vmul.f32 %v383, %v383
      %v489 = vmul.f32 %v386, %v386
      %v490 = vmul.f32 %v389, %v389
      %v491 = vmul.f32 %v392, %v392
      %v492 = vmul.f32 %v395, %v395
      %v493 = vmul.f32 %v398, %v398
      %v494 = vmul.f32 %v401, %v401
      %v495 = vmul.f32 %v404, %v404
      %v496 = vmul.f32 %v407, %v407
      %v497 = vmul.f32 %v410, %v410
      %v498 = vmul.f32 %v413, %v413
      %v499 = vmul.f32 %v416, %v416
      %v500 = vmul.f32 %v419, %v419
      %v501 = vmul.f32 %v422, %v422
      %v502 = vmul.f32 %v425, %v425
      %v503 = vmul.f32 %v428, %v428
      %v504 = vmul.f32 %v431, %v431
      %v505 = vmul.f32 %v434, %v434
      %v506 = vmul.f32 %v437, %v437
      %v507 = vmul.f32 %v440, %v440
      %v508 = vmul.f32 %v443, %v443
      %v509 = vmul.f32 %v477, %v350
      %v510 = vmul.f32 %v478, %v353
      %v511 = vmul.f32 %v479, %v356
      %v512 = vmul.f32 %v480, %v359
      %v513 = vmul.f32 %v481, %v362
      %v514 = vmul.f32 %v482, %v365
      %v515 = vmul.f32 %v483, %v368
      %v516 = vmul.f32 %v484, %v371
      %v517 = vmul.f32 %v485, %v374
      %v518 = vmul.f32 %v486, %v377
      %v519 = vmul.f32 %v487, %v380
      %v520 = vmul.f32 %v488, %v383
      %v521 = vmul.f32 %v489, %v386
      %v522 = vmul.f32 %v490, %v389
      %v523 = vmul.f32 %v491, %v392
      %v524 = vmul.f32 %v492, %v395
      %v525 = vmul.f32 %v493, %v398
      %v526 = vmul.f32 %v494, %v401
      %v527 = vmul.f32 %v495, %v404
      %v528 = vmul.f32 %v496, %v407
      %v529 = vmul.f32 %v497, %v410
      %v530 = vmul.f32 %v498, %v413
      %v531 = vmul.f32 %v499, %v416
      %v532 = vmul.f32 %v500, %v419
      %v533 = vmul.f32 %v501, %v422
      %v534 = vmul.f32 %v502, %v425
      %v535 = vmul.f32 %v503, %v428
      %v536 = vmul.f32 %v504, %v431
      %v537 = vmul.f32 %v505, %v434
      %v538 = vmul.f32 %v506, %v437
      %v539 = vmul.f32 %v507, %v440
      %v540 = vmul.f32 %v508, %v443
      %v541 = vmul.f32 %v509, 0.044715
      %v542 = vmul.f32 %v510, 0.044715
      %v543 = vmul.f32 %v511, 0.044715
      %v544 = vmul.f32 %v512, 0.044715
      %v545 = vmul.f32 %v513, 0.044715
      %v546 = vmul.f32 %v514, 0.044715
      %v547 = vmul.f32 %v515, 0.044715
      %v548 = vmul.f32 %v516, 0.044715
      %v549 = vmul.f32 %v517, 0.044715
      %v550 = vmul.f32 %v518, 0.044715
      %v551 = vmul.f32 %v519, 0.044715
      %v552 = vmul.f32 %v520, 0.044715
      %v553 = vmul.f32 %v521, 0.044715
      %v554 = vmul.f32 %v522, 0.044715
      %v555 = vmul.f32 %v523, 0.044715
      %v556 = vmul.f32 %v524, 0.044715
      %v557 = vmul.f32 %v525, 0.044715
      %v558 = vmul.f32 %v526, 0.044715
      %v559 = vmul.f32 %v527, 0.044715
      %v560 = vmul.f32 %v528, 0.044715
      %v561 = vmul.f32 %v529, 0.044715
      %v562 = vmul.f32 %v530, 0.044715
      %v563 = vmul.f32 %v531, 0.044715
      %v564 = vmul.f32 %v532, 0.044715
      %v565 = vmul.f32 %v533, 0.044715
      %v566 = vmul.f32 %v534, 0.044715
      %v567 = vmul.f32 %v535, 0.044715
      %v568 = vmul.f32 %v536, 0.044715
      %v569 = vmul.f32 %v537, 0.044715
      %v570 = vmul.f32 %v538, 0.044715
      %v571 = vmul.f32 %v539, 0.044715
      %v572 = vmul.f32 %v540, 0.044715
      %v573 = vadd.f32 %v350, %v541
      %v574 = vadd.f32 %v353, %v542
      %v575 = vadd.f32 %v356, %v543
      %v576 = vadd.f32 %v359, %v544
      %v577 = vadd.f32 %v362, %v545
      %v578 = vadd.f32 %v365, %v546
      %v579 = vadd.f32 %v368, %v547
      %v580 = vadd.f32 %v371, %v548
      %v581 = vadd.f32 %v374, %v549
      %v582 = vadd.f32 %v377, %v550
      %v583 = vadd.f32 %v380, %v551
      %v584 = vadd.f32 %v383, %v552
      %v585 = vadd.f32 %v386, %v553
      %v586 = vadd.f32 %v389, %v554
      %v587 = vadd.f32 %v392, %v555
      %v588 = vadd.f32 %v395, %v556
      %v589 = vadd.f32 %v398, %v557
      %v590 = vadd.f32 %v401, %v558
      %v591 = vadd.f32 %v404, %v559
      %v592 = vadd.f32 %v407, %v560
      %v593 = vadd.f32 %v410, %v561
      %v594 = vadd.f32 %v413, %v562
      %v595 = vadd.f32 %v416, %v563
      %v596 = vadd.f32 %v419, %v564
      %v597 = vadd.f32 %v422, %v565
      %v598 = vadd.f32 %v425, %v566
      %v599 = vadd.f32 %v428, %v567
      %v600 = vadd.f32 %v431, %v568
      %v601 = vadd.f32 %v434, %v569
      %v602 = vadd.f32 %v437, %v570
      %v603 = vadd.f32 %v440, %v571
      %v604 = vadd.f32 %v443, %v572
      %v605 = vmul.f32 %v573, 0.7978846
      %v606 = vmul.f32 %v574, 0.7978846
      %v607 = vmul.f32 %v575, 0.7978846
      %v608 = vmul.f32 %v576, 0.7978846
      %v609 = vmul.f32 %v577, 0.7978846
      %v610 = vmul.f32 %v578, 0.7978846
      %v611 = vmul.f32 %v579, 0.7978846
      %v612 = vmul.f32 %v580, 0.7978846
      %v613 = vmul.f32 %v581, 0.7978846
      %v614 = vmul.f32 %v582, 0.7978846
      %v615 = vmul.f32 %v583, 0.7978846
      %v616 = vmul.f32 %v584, 0.7978846
      %v617 = vmul.f32 %v585, 0.7978846
      %v618 = vmul.f32 %v586, 0.7978846
      %v619 = vmul.f32 %v587, 0.7978846
      %v620 = vmul.f32 %v588, 0.7978846
      %v621 = vmul.f32 %v589, 0.7978846
      %v622 = vmul.f32 %v590, 0.7978846
      %v623 = vmul.f32 %v591, 0.7978846
      %v624 = vmul.f32 %v592, 0.7978846
      %v625 = vmul.f32 %v593, 0.7978846
      %v626 = vmul.f32 %v594, 0.7978846
      %v627 = vmul.f32 %v595, 0.7978846
      %v628 = vmul.f32 %v596, 0.7978846
      %v629 = vmul.f32 %v597, 0.7978846
      %v630 = vmul.f32 %v598, 0.7978846
      %v631 = vmul.f32 %v599, 0.7978846
      %v632 = vmul.f32 %v600, 0.7978846
      %v633 = vmul.f32 %v601, 0.7978846
      %v634 = vmul.f32 %v602, 0.7978846
      %v635 = vmul.f32 %v603, 0.7978846
      %v636 = vmul.f32 %v604, 0.7978846
      %v637 = vtanh.pop %v605
      %v638 = vtanh.pop %v606
      %v639 = vtanh.pop %v607
      %v640 = vtanh.pop %v608
      %v641 = vtanh.pop %v609
      %v642 = vtanh.pop %v610
      %v643 = vtanh.pop %v611
      %v644 = vtanh.pop %v612
      %v645 = vtanh.pop %v613
      %v646 = vtanh.pop %v614
      %v647 = vtanh.pop %v615
      %v648 = vtanh.pop %v616
      %v649 = vtanh.pop %v617
      %v650 = vtanh.pop %v618
      %v651 = vtanh.pop %v619
      %v652 = vtanh.pop %v620
      %v653 = vtanh.pop %v621
      %v654 = vtanh.pop %v622
      %v655 = vtanh.pop %v623
      %v656 = vtanh.pop %v624
      %v657 = vtanh.pop %v625
      %v658 = vtanh.pop %v626
      %v659 = vtanh.pop %v627
      %v660 = vtanh.pop %v628
      %v661 = vtanh.pop %v629
      %v662 = vtanh.pop %v630
      %v663 = vtanh.pop %v631
      %v664 = vtanh.pop %v632
      %v665 = vtanh.pop %v633
      %v666 = vtanh.pop %v634
      %v667 = vtanh.pop %v635
      %v668 = vtanh.pop %v636
      %v669 = vadd.f32 %v637, 1.0
      %v670 = vadd.f32 %v638, 1.0
      %v671 = vadd.f32 %v639, 1.0
      %v672 = vadd.f32 %v640, 1.0
      %v673 = vadd.f32 %v641, 1.0
      %v674 = vadd.f32 %v642, 1.0
      %v675 = vadd.f32 %v643, 1.0
      %v676 = vadd.f32 %v644, 1.0
      %v677 = vadd.f32 %v645, 1.0
      %v678 = vadd.f32 %v646, 1.0
      %v679 = vadd.f32 %v647, 1.0
      %v680 = vadd.f32 %v648, 1.0
      %v681 = vadd.f32 %v649, 1.0
      %v682 = vadd.f32 %v650, 1.0
      %v683 = vadd.f32 %v651, 1.0
      %v684 = vadd.f32 %v652, 1.0
      %v685 = vadd.f32 %v653, 1.0
      %v686 = vadd.f32 %v654, 1.0
      %v687 = vadd.f32 %v655, 1.0
      %v688 = vadd.f32 %v656, 1.0
      %v689 = vadd.f32 %v657, 1.0
      %v690 = vadd.f32 %v658, 1.0
      %v691 = vadd.f32 %v659, 1.0
      %v692 = vadd.f32 %v660, 1.0
      %v693 = vadd.f32 %v661, 1.0
      %v694 = vadd.f32 %v662, 1.0
      %v695 = vadd.f32 %v663, 1.0
      %v696 = vadd.f32 %v664, 1.0
      %v697 = vadd.f32 %v665, 1.0
      %v698 = vadd.f32 %v666, 1.0
      %v699 = vadd.f32 %v667, 1.0
      %v700 = vadd.f32 %v668, 1.0
      %v701 = vmul.f32 %v445, %v669
      %v702 = vmul.f32 %v446, %v670
      %v703 = vmul.f32 %v447, %v671
      %v704 = vmul.f32 %v448, %v672
      %v705 = vmul.f32 %v449, %v673
      %v706 = vmul.f32 %v450, %v674
      %v707 = vmul.f32 %v451, %v675
      %v708 = vmul.f32 %v452, %v676
      %v709 = vmul.f32 %v453, %v677
      %v710 = vmul.f32 %v454, %v678
      %v711 = vmul.f32 %v455, %v679
      %v712 = vmul.f32 %v456, %v680
      %v713 = vmul.f32 %v457, %v681
      %v714 = vmul.f32 %v458, %v682
      %v715 = vmul.f32 %v459, %v683
      %v716 = vmul.f32 %v460, %v684
      %v717 = vmul.f32 %v461, %v685
      %v718 = vmul.f32 %v462, %v686
      %v719 = vmul.f32 %v463, %v687
      %v720 = vmul.f32 %v464, %v688
      %v721 = vmul.f32 %v465, %v689
      %v722 = vmul.f32 %v466, %v690
      %v723 = vmul.f32 %v467, %v691
      %v724 = vmul.f32 %v468, %v692
      %v725 = vmul.f32 %v469, %v693
      %v726 = vmul.f32 %v470, %v694
      %v727 = vmul.f32 %v471, %v695
      %v728 = vmul.f32 %v472, %v696
      %v729 = vmul.f32 %v473, %v697
      %v730 = vmul.f32 %v474, %v698
      %v731 = vmul.f32 %v475, %v699
      %v732 = vmul.f32 %v476, %v700
      %vm733 = vcmask 130048
      %734 = vst.msk [vmem:[#allocation2] sm:$0xff] %vm733, 0.0
      %735 = vst.msk [vmem:[#allocation2 + $0x8] sm:$0xff] %vm733, 0.0
      %vm736 = vcmask 123904
      %737 = vst.msk [vmem:[#allocation2 + $0x10] sm:$0x3] %vm736, 0.0
      %738 = vst.msk [vmem:[#allocation2 + $0x18] sm:$0xff] %vm733, 0.0
      %739 = vst.msk [vmem:[#allocation2 + $0x20] sm:$0xff] %vm733, 0.0
      %740 = vst.msk [vmem:[#allocation2 + $0x28] sm:$0x3] %vm736, 0.0
      %741 = vst.msk [vmem:[#allocation2 + $0x30] sm:$0xff] %vm733, 0.0
      %742 = vst.msk [vmem:[#allocation2 + $0x38] sm:$0xff] %vm733, 0.0
      %743 = vst.msk [vmem:[#allocation2 + $0x40] sm:$0x3] %vm736, 0.0
      %744 = vst.msk [vmem:[#allocation2 + $0x48] sm:$0xff] %vm733, 0.0
      %745 = vst.msk [vmem:[#allocation2 + $0x50] sm:$0xff] %vm733, 0.0
      %746 = vst.msk [vmem:[#allocation2 + $0x58] sm:$0x3] %vm736, 0.0
      %747 = vst.msk [vmem:[#allocation2 + $0x60] sm:$0xff] %vm733, 0.0
      %748 = vst.msk [vmem:[#allocation2 + $0x68] sm:$0xff] %vm733, 0.0
      %749 = vst.msk [vmem:[#allocation2 + $0x70] sm:$0x3] %vm736, 0.0
      %750 = vst.msk [vmem:[#allocation2 + $0x78] sm:$0xff] %vm733, 0.0
      %751 = vst.msk [vmem:[#allocation2 + $0x80] sm:$0xff] %vm733, 0.0
      %752 = vst.msk [vmem:[#allocation2 + $0x88] sm:$0x3] %vm736, 0.0
      %753 = vst.msk [vmem:[#allocation2 + $0x90] sm:$0xff] %vm733, 0.0
      %754 = vst.msk [vmem:[#allocation2 + $0x98] sm:$0xff] %vm733, 0.0
      %755 = vst.msk [vmem:[#allocation2 + $0xa0] sm:$0x3] %vm736, 0.0
      %756 = vst.msk [vmem:[#allocation2 + $0xa8] sm:$0xff] %vm733, 0.0
      %757 = vst.msk [vmem:[#allocation2 + $0xb0] sm:$0xff] %vm733, 0.0
      %758 = vst.msk [vmem:[#allocation2 + $0xb8] sm:$0x3] %vm736, 0.0
      %759 = vst.msk [vmem:[#allocation2 + $0xc0] sm:$0xff] %vm733, 0.0
      %760 = vst.msk [vmem:[#allocation2 + $0xc8] sm:$0xff] %vm733, 0.0
      %761 = vst.msk [vmem:[#allocation2 + $0xd0] sm:$0x3] %vm736, 0.0
      %762 = vst.msk [vmem:[#allocation2 + $0xd8] sm:$0xff] %vm733, 0.0
      %763 = vst.msk [vmem:[#allocation2 + $0xe0] sm:$0xff] %vm733, 0.0
      %764 = vst.msk [vmem:[#allocation2 + $0xe8] sm:$0x3] %vm736, 0.0
      %765 = vst.msk [vmem:[#allocation2 + $0xf0] sm:$0xff] %vm733, 0.0
      %766 = vst.msk [vmem:[#allocation2 + $0xf8] sm:$0xff] %vm733, 0.0
      %767 = vst.msk [vmem:[#allocation2 + $0x100] sm:$0x3] %vm736, 0.0
      %768 = vst.msk [vmem:[#allocation2 + $0x108] sm:$0xff] %vm733, 0.0
      %769 = vst.msk [vmem:[#allocation2 + $0x110] sm:$0xff] %vm733, 0.0
      %770 = vst.msk [vmem:[#allocation2 + $0x118] sm:$0x3] %vm736, 0.0
      %771 = vst.msk [vmem:[#allocation2 + $0x120] sm:$0xff] %vm733, 0.0
      %772 = vst.msk [vmem:[#allocation2 + $0x128] sm:$0xff] %vm733, 0.0
      %773 = vst.msk [vmem:[#allocation2 + $0x130] sm:$0x3] %vm736, 0.0
      %774 = vst.msk [vmem:[#allocation2 + $0x138] sm:$0xff] %vm733, 0.0
      %775 = vst.msk [vmem:[#allocation2 + $0x140] sm:$0xff] %vm733, 0.0
      %776 = vst.msk [vmem:[#allocation2 + $0x148] sm:$0x3] %vm736, 0.0
      %777 = vst.msk [vmem:[#allocation2 + $0x150] sm:$0xff] %vm733, 0.0
      %778 = vst.msk [vmem:[#allocation2 + $0x158] sm:$0xff] %vm733, 0.0
      %779 = vst.msk [vmem:[#allocation2 + $0x160] sm:$0x3] %vm736, 0.0
      %780 = vst.msk [vmem:[#allocation2 + $0x168] sm:$0xff] %vm733, 0.0
      %781 = vst.msk [vmem:[#allocation2 + $0x170] sm:$0xff] %vm733, 0.0
      %782 = vst.msk [vmem:[#allocation2 + $0x178] sm:$0x3] %vm736, 0.0
      %783 = vst.msk [vmem:[#allocation2 + $0x180] sm:$0xff] %vm733, 0.0
      %784 = vst.msk [vmem:[#allocation2 + $0x188] sm:$0xff] %vm733, 0.0
      %785 = vst.msk [vmem:[#allocation2 + $0x190] sm:$0x3] %vm736, 0.0
      %786 = vst.msk [vmem:[#allocation2 + $0x198] sm:$0xff] %vm733, 0.0
      %787 = vst.msk [vmem:[#allocation2 + $0x1a0] sm:$0xff] %vm733, 0.0
      %788 = vst.msk [vmem:[#allocation2 + $0x1a8] sm:$0x3] %vm736, 0.0
      %s789 = scalar_lea.vmem [#allocation2], 24
      %790 = vst.msk [vmem:[%s789 + $0x1] sm:$0xff] %vm733, %v701
      %791 = vst.msk [vmem:[%s789 + $0x9] sm:$0xff] %vm733, %v702
      %792 = vst.msk [vmem:[%s789 + $0x19] sm:$0xff] %vm733, %v703
      %793 = vst.msk [vmem:[%s789 + $0x21] sm:$0xff] %vm733, %v704
      %794 = vst.msk [vmem:[%s789 + $0x31] sm:$0xff] %vm733, %v705
      %795 = vst.msk [vmem:[%s789 + $0x39] sm:$0xff] %vm733, %v706
      %796 = vst.msk [vmem:[%s789 + $0x49] sm:$0xff] %vm733, %v707
      %797 = vst.msk [vmem:[%s789 + $0x51] sm:$0xff] %vm733, %v708
      %798 = vst.msk [vmem:[%s789 + $0x61] sm:$0xff] %vm733, %v709
      %799 = vst.msk [vmem:[%s789 + $0x69] sm:$0xff] %vm733, %v710
      %800 = vst.msk [vmem:[%s789 + $0x79] sm:$0xff] %vm733, %v711
      %801 = vst.msk [vmem:[%s789 + $0x81] sm:$0xff] %vm733, %v712
      %802 = vst.msk [vmem:[%s789 + $0x91] sm:$0xff] %vm733, %v713
      %803 = vst.msk [vmem:[%s789 + $0x99] sm:$0xff] %vm733, %v714
      %804 = vst.msk [vmem:[%s789 + $0xa9] sm:$0xff] %vm733, %v715
      %805 = vst.msk [vmem:[%s789 + $0xb1] sm:$0xff] %vm733, %v716
      %806 = vst.msk [vmem:[%s789 + $0xc1] sm:$0xff] %vm733, %v717
      %807 = vst.msk [vmem:[%s789 + $0xc9] sm:$0xff] %vm733, %v718
      %808 = vst.msk [vmem:[%s789 + $0xd9] sm:$0xff] %vm733, %v719
      %809 = vst.msk [vmem:[%s789 + $0xe1] sm:$0xff] %vm733, %v720
      %810 = vst.msk [vmem:[%s789 + $0xf1] sm:$0xff] %vm733, %v721
      %811 = vst.msk [vmem:[%s789 + $0xf9] sm:$0xff] %vm733, %v722
      %812 = vst.msk [vmem:[%s789 + $0x109] sm:$0xff] %vm733, %v723
      %813 = vst.msk [vmem:[%s789 + $0x111] sm:$0xff] %vm733, %v724
      %814 = vst.msk [vmem:[%s789 + $0x121] sm:$0xff] %vm733, %v725
      %815 = vst.msk [vmem:[%s789 + $0x129] sm:$0xff] %vm733, %v726
      %816 = vst.msk [vmem:[%s789 + $0x139] sm:$0xff] %vm733, %v727
      %817 = vst.msk [vmem:[%s789 + $0x141] sm:$0xff] %vm733, %v728
      %818 = vst.msk [vmem:[%s789 + $0x151] sm:$0xff] %vm733, %v729
      %819 = vst.msk [vmem:[%s789 + $0x159] sm:$0xff] %vm733, %v730
      %820 = vst.msk [vmem:[%s789 + $0x169] sm:$0xff] %vm733, %v731
      %821 = vst.msk [vmem:[%s789 + $0x171] sm:$0xff] %vm733, %v732
      %v822 = vld [vmem:[#allocation2] sm:$0xff]
      %v823 = vld [vmem:[#allocation2 + $0x8] sm:$0xff]
      %v824 = vld [vmem:[#allocation2 + $0x18] sm:$0xff]
      %v825 = vld [vmem:[#allocation2 + $0x20] sm:$0xff]
      %v826 = vld [vmem:[#allocation2 + $0x30] sm:$0xff]
      %v827 = vld [vmem:[#allocation2 + $0x38] sm:$0xff]
      %v828 = vld [vmem:[#allocation2 + $0x48] sm:$0xff]
      %v829 = vld [vmem:[#allocation2 + $0x50] sm:$0xff]
      %v830 = vld [vmem:[#allocation2 + $0x60] sm:$0xff]
      %v831 = vld [vmem:[#allocation2 + $0x68] sm:$0xff]
      %v832 = vld [vmem:[#allocation2 + $0x78] sm:$0xff]
      %v833 = vld [vmem:[#allocation2 + $0x80] sm:$0xff]
      %v834 = vld [vmem:[#allocation2 + $0x90] sm:$0xff]
      %v835 = vld [vmem:[#allocation2 + $0x98] sm:$0xff]
      %v836 = vld [vmem:[#allocation2 + $0xa8] sm:$0xff]
      %v837 = vld [vmem:[#allocation2 + $0xb0] sm:$0xff]
      %v838 = vld [vmem:[#allocation2 + $0xc0] sm:$0xff]
      %v839 = vld [vmem:[#allocation2 + $0xc8] sm:$0xff]
      %v840 = vld [vmem:[#allocation2 + $0xd8] sm:$0xff]
      %v841 = vld [vmem:[#allocation2 + $0xe0] sm:$0xff]
      %v842 = vld [vmem:[#allocation2 + $0xf0] sm:$0xff]
      %v843 = vld [vmem:[#allocation2 + $0xf8] sm:$0xff]
      %v844 = vld [vmem:[#allocation2 + $0x108] sm:$0xff]
      %v845 = vld [vmem:[#allocation2 + $0x110] sm:$0xff]
      %v846 = vld [vmem:[#allocation2 + $0x120] sm:$0xff]
      %v847 = vld [vmem:[#allocation2 + $0x128] sm:$0xff]
      %v848 = vld [vmem:[#allocation2 + $0x138] sm:$0xff]
      %v849 = vld [vmem:[#allocation2 + $0x140] sm:$0xff]
      %v850 = vld [vmem:[#allocation2 + $0x150] sm:$0xff]
      %v851 = vld [vmem:[#allocation2 + $0x158] sm:$0xff]
      %v852 = vld [vmem:[#allocation2 + $0x168] sm:$0xff]
      %v853 = vld [vmem:[#allocation2 + $0x170] sm:$0xff]
      %v854 = vld [vmem:[%s2] sm:$0x1]
      %v855 = vperm.slane %v854, 0
      %v856 = vmul.f32 %v822, %v855
      %v857 = vmul.f32 %v823, %v855
      %v858 = vmul.f32 %v824, %v855
      %v859 = vmul.f32 %v825, %v855
      %v860 = vmul.f32 %v826, %v855
      %v861 = vmul.f32 %v827, %v855
      %v862 = vmul.f32 %v828, %v855
      %v863 = vmul.f32 %v829, %v855
      %v864 = vmul.f32 %v830, %v855
      %v865 = vmul.f32 %v831, %v855
      %v866 = vmul.f32 %v832, %v855
      %v867 = vmul.f32 %v833, %v855
      %v868 = vmul.f32 %v834, %v855
      %v869 = vmul.f32 %v835, %v855
      %v870 = vmul.f32 %v836, %v855
      %v871 = vmul.f32 %v837, %v855
      %v872 = vmul.f32 %v838, %v855
      %v873 = vmul.f32 %v839, %v855
      %v874 = vmul.f32 %v840, %v855
      %v875 = vmul.f32 %v841, %v855
      %v876 = vmul.f32 %v842, %v855
      %v877 = vmul.f32 %v843, %v855
      %v878 = vmul.f32 %v844, %v855
      %v879 = vmul.f32 %v845, %v855
      %v880 = vmul.f32 %v846, %v855
      %v881 = vmul.f32 %v847, %v855
      %v882 = vmul.f32 %v848, %v855
      %v883 = vmul.f32 %v849, %v855
      %v884 = vmul.f32 %v850, %v855
      %v885 = vmul.f32 %v851, %v855
      %v886 = vmul.f32 %v852, %v855
      %v887 = vmul.f32 %v853, %v855
      %v888 = vadd.f32 %v856, 0.0
      %v889 = vadd.f32 %v857, 0.0
      %v890 = vadd.f32 %v858, 0.0
      %v891 = vadd.f32 %v859, 0.0
      %v892 = vadd.f32 %v860, 0.0
      %v893 = vadd.f32 %v861, 0.0
      %v894 = vadd.f32 %v862, 0.0
      %v895 = vadd.f32 %v863, 0.0
      %v896 = vadd.f32 %v864, 0.0
      %v897 = vadd.f32 %v865, 0.0
      %v898 = vadd.f32 %v866, 0.0
      %v899 = vadd.f32 %v867, 0.0
      %v900 = vadd.f32 %v868, 0.0
      %v901 = vadd.f32 %v869, 0.0
      %v902 = vadd.f32 %v870, 0.0
      %v903 = vadd.f32 %v871, 0.0
      %v904 = vadd.f32 %v872, 0.0
      %v905 = vadd.f32 %v873, 0.0
      %v906 = vadd.f32 %v874, 0.0
      %v907 = vadd.f32 %v875, 0.0
      %v908 = vadd.f32 %v876, 0.0
      %v909 = vadd.f32 %v877, 0.0
      %v910 = vadd.f32 %v878, 0.0
      %v911 = vadd.f32 %v879, 0.0
      %v912 = vadd.f32 %v880, 0.0
      %v913 = vadd.f32 %v881, 0.0
      %v914 = vadd.f32 %v882, 0.0
      %v915 = vadd.f32 %v883, 0.0
      %v916 = vadd.f32 %v884, 0.0
      %v917 = vadd.f32 %v885, 0.0
      %v918 = vadd.f32 %v886, 0.0
      %v919 = vadd.f32 %v887, 0.0
      %v920 = vld [vmem:[#allocation2 + $0x1] sm:$0xff]
      %v921 = vld [vmem:[#allocation2 + $0x9] sm:$0xff]
      %v922 = vld [vmem:[#allocation2 + $0x19] sm:$0xff]
      %v923 = vld [vmem:[#allocation2 + $0x21] sm:$0xff]
      %v924 = vld [vmem:[#allocation2 + $0x31] sm:$0xff]
      %v925 = vld [vmem:[#allocation2 + $0x39] sm:$0xff]
      %v926 = vld [vmem:[#allocation2 + $0x49] sm:$0xff]
      %v927 = vld [vmem:[#allocation2 + $0x51] sm:$0xff]
      %v928 = vld [vmem:[#allocation2 + $0x61] sm:$0xff]
      %v929 = vld [vmem:[#allocation2 + $0x69] sm:$0xff]
      %v930 = vld [vmem:[#allocation2 + $0x79] sm:$0xff]
      %v931 = vld [vmem:[#allocation2 + $0x81] sm:$0xff]
      %v932 = vld [vmem:[#allocation2 + $0x91] sm:$0xff]
      %v933 = vld [vmem:[#allocation2 + $0x99] sm:$0xff]
      %v934 = vld [vmem:[#allocation2 + $0xa9] sm:$0xff]
      %v935 = vld [vmem:[#allocation2 + $0xb1] sm:$0xff]
      %v936 = vld [vmem:[#allocation2 + $0xc1] sm:$0xff]
      %v937 = vld [vmem:[#allocation2 + $0xc9] sm:$0xff]
      %v938 = vld [vmem:[#allocation2 + $0xd9] sm:$0xff]
      %v939 = vld [vmem:[#allocation2 + $0xe1] sm:$0xff]
      %v940 = vld [vmem:[#allocation2 + $0xf1] sm:$0xff]
      %v941 = vld [vmem:[#allocation2 + $0xf9] sm:$0xff]
      %v942 = vld [vmem:[#allocation2 + $0x109] sm:$0xff]
      %v943 = vld [vmem:[#allocation2 + $0x111] sm:$0xff]
      %v944 = vld [vmem:[#allocation2 + $0x121] sm:$0xff]
      %v945 = vld [vmem:[#allocation2 + $0x129] sm:$0xff]
      %v946 = vld [vmem:[#allocation2 + $0x139] sm:$0xff]
      %v947 = vld [vmem:[#allocation2 + $0x141] sm:$0xff]
      %v948 = vld [vmem:[#allocation2 + $0x151] sm:$0xff]
      %v949 = vld [vmem:[#allocation2 + $0x159] sm:$0xff]
      %v950 = vld [vmem:[#allocation2 + $0x169] sm:$0xff]
      %v951 = vld [vmem:[#allocation2 + $0x171] sm:$0xff]
      %v952 = vld [vmem:[%s2 + $0x1] sm:$0x1]
      %v953 = vperm.slane %v952, 0
      %v954 = vmul.f32 %v920, %v953
      %v955 = vmul.f32 %v921, %v953
      %v956 = vmul.f32 %v922, %v953
      %v957 = vmul.f32 %v923, %v953
      %v958 = vmul.f32 %v924, %v953
      %v959 = vmul.f32 %v925, %v953
      %v960 = vmul.f32 %v926, %v953
      %v961 = vmul.f32 %v927, %v953
      %v962 = vmul.f32 %v928, %v953
      %v963 = vmul.f32 %v929, %v953
      %v964 = vmul.f32 %v930, %v953
      %v965 = vmul.f32 %v931, %v953
      %v966 = vmul.f32 %v932, %v953
      %v967 = vmul.f32 %v933, %v953
      %v968 = vmul.f32 %v934, %v953
      %v969 = vmul.f32 %v935, %v953
      %v970 = vmul.f32 %v936, %v953
      %v971 = vmul.f32 %v937, %v953
      %v972 = vmul.f32 %v938, %v953
      %v973 = vmul.f32 %v939, %v953
      %v974 = vmul.f32 %v940, %v953
      %v975 = vmul.f32 %v941, %v953
      %v976 = vmul.f32 %v942, %v953
      %v977 = vmul.f32 %v943, %v953
      %v978 = vmul.f32 %v944, %v953
      %v979 = vmul.f32 %v945, %v953
      %v980 = vmul.f32 %v946, %v953
      %v981 = vmul.f32 %v947, %v953
      %v982 = vmul.f32 %v948, %v953
      %v983 = vmul.f32 %v949, %v953
      %v984 = vmul.f32 %v950, %v953
      %v985 = vmul.f32 %v951, %v953
      %v986 = vadd.f32 %v888, %v954
      %v987 = vadd.f32 %v889, %v955
      %v988 = vadd.f32 %v890, %v956
      %v989 = vadd.f32 %v891, %v957
      %v990 = vadd.f32 %v892, %v958
      %v991 = vadd.f32 %v893, %v959
      %v992 = vadd.f32 %v894, %v960
      %v993 = vadd.f32 %v895, %v961
      %v994 = vadd.f32 %v896, %v962
      %v995 = vadd.f32 %v897, %v963
      %v996 = vadd.f32 %v898, %v964
      %v997 = vadd.f32 %v899, %v965
      %v998 = vadd.f32 %v900, %v966
      %v999 = vadd.f32 %v901, %v967
      %v1000 = vadd.f32 %v902, %v968
      %v1001 = vadd.f32 %v903, %v969
      %v1002 = vadd.f32 %v904, %v970
      %v1003 = vadd.f32 %v905, %v971
      %v1004 = vadd.f32 %v906, %v972
      %v1005 = vadd.f32 %v907, %v973
      %v1006 = vadd.f32 %v908, %v974
      %v1007 = vadd.f32 %v909, %v975
      %v1008 = vadd.f32 %v910, %v976
      %v1009 = vadd.f32 %v911, %v977
      %v1010 = vadd.f32 %v912, %v978
      %v1011 = vadd.f32 %v913, %v979
      %v1012 = vadd.f32 %v914, %v980
      %v1013 = vadd.f32 %v915, %v981
      %v1014 = vadd.f32 %v916, %v982
      %v1015 = vadd.f32 %v917, %v983
      %v1016 = vadd.f32 %v918, %v984
      %v1017 = vadd.f32 %v919, %v985
      %v1018 = vld [vmem:[#allocation2 + $0x2] sm:$0xff]
      %v1019 = vld [vmem:[#allocation2 + $0xa] sm:$0xff]
      %v1020 = vld [vmem:[#allocation2 + $0x1a] sm:$0xff]
      %v1021 = vld [vmem:[#allocation2 + $0x22] sm:$0xff]
      %v1022 = vld [vmem:[#allocation2 + $0x32] sm:$0xff]
      %v1023 = vld [vmem:[#allocation2 + $0x3a] sm:$0xff]
      %v1024 = vld [vmem:[#allocation2 + $0x4a] sm:$0xff]
      %v1025 = vld [vmem:[#allocation2 + $0x52] sm:$0xff]
      %v1026 = vld [vmem:[#allocation2 + $0x62] sm:$0xff]
      %v1027 = vld [vmem:[#allocation2 + $0x6a] sm:$0xff]
      %v1028 = vld [vmem:[#allocation2 + $0x7a] sm:$0xff]
      %v1029 = vld [vmem:[#allocation2 + $0x82] sm:$0xff]
      %v1030 = vld [vmem:[#allocation2 + $0x92] sm:$0xff]
      %v1031 = vld [vmem:[#allocation2 + $0x9a] sm:$0xff]
      %v1032 = vld [vmem:[#allocation2 + $0xaa] sm:$0xff]
      %v1033 = vld [vmem:[#allocation2 + $0xb2] sm:$0xff]
      %v1034 = vld [vmem:[#allocation2 + $0xc2] sm:$0xff]
      %v1035 = vld [vmem:[#allocation2 + $0xca] sm:$0xff]
      %v1036 = vld [vmem:[#allocation2 + $0xda] sm:$0xff]
      %v1037 = vld [vmem:[#allocation2 + $0xe2] sm:$0xff]
      %v1038 = vld [vmem:[#allocation2 + $0xf2] sm:$0xff]
      %v1039 = vld [vmem:[#allocation2 + $0xfa] sm:$0xff]
      %v1040 = vld [vmem:[#allocation2 + $0x10a] sm:$0xff]
      %v1041 = vld [vmem:[#allocation2 + $0x112] sm:$0xff]
      %v1042 = vld [vmem:[#allocation2 + $0x122] sm:$0xff]
      %v1043 = vld [vmem:[#allocation2 + $0x12a] sm:$0xff]
      %v1044 = vld [vmem:[#allocation2 + $0x13a] sm:$0xff]
      %v1045 = vld [vmem:[#allocation2 + $0x142] sm:$0xff]
      %v1046 = vld [vmem:[#allocation2 + $0x152] sm:$0xff]
      %v1047 = vld [vmem:[#allocation2 + $0x15a] sm:$0xff]
      %v1048 = vld [vmem:[#allocation2 + $0x16a] sm:$0xff]
      %v1049 = vld [vmem:[#allocation2 + $0x172] sm:$0xff]
      %v1050 = vld [vmem:[%s2 + $0x2] sm:$0x1]
      %v1051 = vperm.slane %v1050, 0
      %v1052 = vmul.f32 %v1018, %v1051
      %v1053 = vmul.f32 %v1019, %v1051
      %v1054 = vmul.f32 %v1020, %v1051
      %v1055 = vmul.f32 %v1021, %v1051
      %v1056 = vmul.f32 %v1022, %v1051
      %v1057 = vmul.f32 %v1023, %v1051
      %v1058 = vmul.f32 %v1024, %v1051
      %v1059 = vmul.f32 %v1025, %v1051
      %v1060 = vmul.f32 %v1026, %v1051
      %v1061 = vmul.f32 %v1027, %v1051
      %v1062 = vmul.f32 %v1028, %v1051
      %v1063 = vmul.f32 %v1029, %v1051
      %v1064 = vmul.f32 %v1030, %v1051
      %v1065 = vmul.f32 %v1031, %v1051
      %v1066 = vmul.f32 %v1032, %v1051
      %v1067 = vmul.f32 %v1033, %v1051
      %v1068 = vmul.f32 %v1034, %v1051
      %v1069 = vmul.f32 %v1035, %v1051
      %v1070 = vmul.f32 %v1036, %v1051
      %v1071 = vmul.f32 %v1037, %v1051
      %v1072 = vmul.f32 %v1038, %v1051
      %v1073 = vmul.f32 %v1039, %v1051
      %v1074 = vmul.f32 %v1040, %v1051
      %v1075 = vmul.f32 %v1041, %v1051
      %v1076 = vmul.f32 %v1042, %v1051
      %v1077 = vmul.f32 %v1043, %v1051
      %v1078 = vmul.f32 %v1044, %v1051
      %v1079 = vmul.f32 %v1045, %v1051
      %v1080 = vmul.f32 %v1046, %v1051
      %v1081 = vmul.f32 %v1047, %v1051
      %v1082 = vmul.f32 %v1048, %v1051
      %v1083 = vmul.f32 %v1049, %v1051
      %v1084 = vadd.f32 %v986, %v1052
      %v1085 = vadd.f32 %v987, %v1053
      %v1086 = vadd.f32 %v988, %v1054
      %v1087 = vadd.f32 %v989, %v1055
      %v1088 = vadd.f32 %v990, %v1056
      %v1089 = vadd.f32 %v991, %v1057
      %v1090 = vadd.f32 %v992, %v1058
      %v1091 = vadd.f32 %v993, %v1059
      %v1092 = vadd.f32 %v994, %v1060
      %v1093 = vadd.f32 %v995, %v1061
      %v1094 = vadd.f32 %v996, %v1062
      %v1095 = vadd.f32 %v997, %v1063
      %v1096 = vadd.f32 %v998, %v1064
      %v1097 = vadd.f32 %v999, %v1065
      %v1098 = vadd.f32 %v1000, %v1066
      %v1099 = vadd.f32 %v1001, %v1067
      %v1100 = vadd.f32 %v1002, %v1068
      %v1101 = vadd.f32 %v1003, %v1069
      %v1102 = vadd.f32 %v1004, %v1070
      %v1103 = vadd.f32 %v1005, %v1071
      %v1104 = vadd.f32 %v1006, %v1072
      %v1105 = vadd.f32 %v1007, %v1073
      %v1106 = vadd.f32 %v1008, %v1074
      %v1107 = vadd.f32 %v1009, %v1075
      %v1108 = vadd.f32 %v1010, %v1076
      %v1109 = vadd.f32 %v1011, %v1077
      %v1110 = vadd.f32 %v1012, %v1078
      %v1111 = vadd.f32 %v1013, %v1079
      %v1112 = vadd.f32 %v1014, %v1080
      %v1113 = vadd.f32 %v1015, %v1081
      %v1114 = vadd.f32 %v1016, %v1082
      %v1115 = vadd.f32 %v1017, %v1083
      %v1116 = vld [vmem:[%s789] sm:$0xff]
      %v1117 = vld [vmem:[%s789 + $0x8] sm:$0xff]
      %v1118 = vld [vmem:[%s789 + $0x18] sm:$0xff]
      %v1119 = vld [vmem:[%s789 + $0x20] sm:$0xff]
      %v1120 = vld [vmem:[%s789 + $0x30] sm:$0xff]
      %v1121 = vld [vmem:[%s789 + $0x38] sm:$0xff]
      %v1122 = vld [vmem:[%s789 + $0x48] sm:$0xff]
      %v1123 = vld [vmem:[%s789 + $0x50] sm:$0xff]
      %v1124 = vld [vmem:[%s789 + $0x60] sm:$0xff]
      %v1125 = vld [vmem:[%s789 + $0x68] sm:$0xff]
      %v1126 = vld [vmem:[%s789 + $0x78] sm:$0xff]
      %v1127 = vld [vmem:[%s789 + $0x80] sm:$0xff]
      %v1128 = vld [vmem:[%s789 + $0x90] sm:$0xff]
      %v1129 = vld [vmem:[%s789 + $0x98] sm:$0xff]
      %v1130 = vld [vmem:[%s789 + $0xa8] sm:$0xff]
      %v1131 = vld [vmem:[%s789 + $0xb0] sm:$0xff]
      %v1132 = vld [vmem:[%s789 + $0xc0] sm:$0xff]
      %v1133 = vld [vmem:[%s789 + $0xc8] sm:$0xff]
      %v1134 = vld [vmem:[%s789 + $0xd8] sm:$0xff]
      %v1135 = vld [vmem:[%s789 + $0xe0] sm:$0xff]
      %v1136 = vld [vmem:[%s789 + $0xf0] sm:$0xff]
      %v1137 = vld [vmem:[%s789 + $0xf8] sm:$0xff]
      %v1138 = vld [vmem:[%s789 + $0x108] sm:$0xff]
      %v1139 = vld [vmem:[%s789 + $0x110] sm:$0xff]
      %v1140 = vld [vmem:[%s789 + $0x120] sm:$0xff]
      %v1141 = vld [vmem:[%s789 + $0x128] sm:$0xff]
      %v1142 = vld [vmem:[%s789 + $0x138] sm:$0xff]
      %v1143 = vld [vmem:[%s789 + $0x140] sm:$0xff]
      %v1144 = vld [vmem:[%s789 + $0x150] sm:$0xff]
      %v1145 = vld [vmem:[%s789 + $0x158] sm:$0xff]
      %v1146 = vld [vmem:[%s789 + $0x168] sm:$0xff]
      %v1147 = vld [vmem:[%s789 + $0x170] sm:$0xff]
      %v1148 = vld [vmem:[%s2 + $0x3] sm:$0x1]
      %v1149 = vperm.slane %v1148, 0
      %v1150 = vmul.f32 %v1116, %v1149
      %v1151 = vmul.f32 %v1117, %v1149
      %v1152 = vmul.f32 %v1118, %v1149
      %v1153 = vmul.f32 %v1119, %v1149
      %v1154 = vmul.f32 %v1120, %v1149
      %v1155 = vmul.f32 %v1121, %v1149
      %v1156 = vmul.f32 %v1122, %v1149
      %v1157 = vmul.f32 %v1123, %v1149
      %v1158 = vmul.f32 %v1124, %v1149
      %v1159 = vmul.f32 %v1125, %v1149
      %v1160 = vmul.f32 %v1126, %v1149
      %v1161 = vmul.f32 %v1127, %v1149
      %v1162 = vmul.f32 %v1128, %v1149
      %v1163 = vmul.f32 %v1129, %v1149
      %v1164 = vmul.f32 %v1130, %v1149
      %v1165 = vmul.f32 %v1131, %v1149
      %v1166 = vmul.f32 %v1132, %v1149
      %v1167 = vmul.f32 %v1133, %v1149
      %v1168 = vmul.f32 %v1134, %v1149
      %v1169 = vmul.f32 %v1135, %v1149
      %v1170 = vmul.f32 %v1136, %v1149
      %v1171 = vmul.f32 %v1137, %v1149
      %v1172 = vmul.f32 %v1138, %v1149
      %v1173 = vmul.f32 %v1139, %v1149
      %v1174 = vmul.f32 %v1140, %v1149
      %v1175 = vmul.f32 %v1141, %v1149
      %v1176 = vmul.f32 %v1142, %v1149
      %v1177 = vmul.f32 %v1143, %v1149
      %v1178 = vmul.f32 %v1144, %v1149
      %v1179 = vmul.f32 %v1145, %v1149
      %v1180 = vmul.f32 %v1146, %v1149
      %v1181 = vmul.f32 %v1147, %v1149
      %v1182 = vadd.f32 %v1084, %v1150
      %v1183 = vadd.f32 %v1085, %v1151
      %v1184 = vadd.f32 %v1086, %v1152
      %v1185 = vadd.f32 %v1087, %v1153
      %v1186 = vadd.f32 %v1088, %v1154
      %v1187 = vadd.f32 %v1089, %v1155
      %v1188 = vadd.f32 %v1090, %v1156
      %v1189 = vadd.f32 %v1091, %v1157
      %v1190 = vadd.f32 %v1092, %v1158
      %v1191 = vadd.f32 %v1093, %v1159
      %v1192 = vadd.f32 %v1094, %v1160
      %v1193 = vadd.f32 %v1095, %v1161
      %v1194 = vadd.f32 %v1096, %v1162
      %v1195 = vadd.f32 %v1097, %v1163
      %v1196 = vadd.f32 %v1098, %v1164
      %v1197 = vadd.f32 %v1099, %v1165
      %v1198 = vadd.f32 %v1100, %v1166
      %v1199 = vadd.f32 %v1101, %v1167
      %v1200 = vadd.f32 %v1102, %v1168
      %v1201 = vadd.f32 %v1103, %v1169
      %v1202 = vadd.f32 %v1104, %v1170
      %v1203 = vadd.f32 %v1105, %v1171
      %v1204 = vadd.f32 %v1106, %v1172
      %v1205 = vadd.f32 %v1107, %v1173
      %v1206 = vadd.f32 %v1108, %v1174
      %v1207 = vadd.f32 %v1109, %v1175
      %v1208 = vadd.f32 %v1110, %v1176
      %v1209 = vadd.f32 %v1111, %v1177
      %v1210 = vadd.f32 %v1112, %v1178
      %v1211 = vadd.f32 %v1113, %v1179
      %v1212 = vadd.f32 %v1114, %v1180
      %v1213 = vadd.f32 %v1115, %v1181
      %v1214 = vld [vmem:[%s789 + $0x1] sm:$0xff]
      %v1215 = vld [vmem:[%s789 + $0x9] sm:$0xff]
      %v1216 = vld [vmem:[%s789 + $0x19] sm:$0xff]
      %v1217 = vld [vmem:[%s789 + $0x21] sm:$0xff]
      %v1218 = vld [vmem:[%s789 + $0x31] sm:$0xff]
      %v1219 = vld [vmem:[%s789 + $0x39] sm:$0xff]
      %v1220 = vld [vmem:[%s789 + $0x49] sm:$0xff]
      %v1221 = vld [vmem:[%s789 + $0x51] sm:$0xff]
      %v1222 = vld [vmem:[%s789 + $0x61] sm:$0xff]
      %v1223 = vld [vmem:[%s789 + $0x69] sm:$0xff]
      %v1224 = vld [vmem:[%s789 + $0x79] sm:$0xff]
      %v1225 = vld [vmem:[%s789 + $0x81] sm:$0xff]
      %v1226 = vld [vmem:[%s789 + $0x91] sm:$0xff]
      %v1227 = vld [vmem:[%s789 + $0x99] sm:$0xff]
      %v1228 = vld [vmem:[%s789 + $0xa9] sm:$0xff]
      %v1229 = vld [vmem:[%s789 + $0xb1] sm:$0xff]
      %v1230 = vld [vmem:[%s789 + $0xc1] sm:$0xff]
      %v1231 = vld [vmem:[%s789 + $0xc9] sm:$0xff]
      %v1232 = vld [vmem:[%s789 + $0xd9] sm:$0xff]
      %v1233 = vld [vmem:[%s789 + $0xe1] sm:$0xff]
      %v1234 = vld [vmem:[%s789 + $0xf1] sm:$0xff]
      %v1235 = vld [vmem:[%s789 + $0xf9] sm:$0xff]
      %v1236 = vld [vmem:[%s789 + $0x109] sm:$0xff]
      %v1237 = vld [vmem:[%s789 + $0x111] sm:$0xff]
      %v1238 = vld [vmem:[%s789 + $0x121] sm:$0xff]
      %v1239 = vld [vmem:[%s789 + $0x129] sm:$0xff]
      %v1240 = vld [vmem:[%s789 + $0x139] sm:$0xff]
      %v1241 = vld [vmem:[%s789 + $0x141] sm:$0xff]
      %v1242 = vld [vmem:[%s789 + $0x151] sm:$0xff]
      %v1243 = vld [vmem:[%s789 + $0x159] sm:$0xff]
      %v1244 = vld [vmem:[%s789 + $0x169] sm:$0xff]
      %v1245 = vld [vmem:[%s789 + $0x171] sm:$0xff]
      %v1246 = vld [vmem:[%s2 + $0x4] sm:$0x1]
      %v1247 = vperm.slane %v1246, 0
      %v1248 = vmul.f32 %v1214, %v1247
      %v1249 = vmul.f32 %v1215, %v1247
      %v1250 = vmul.f32 %v1216, %v1247
      %v1251 = vmul.f32 %v1217, %v1247
      %v1252 = vmul.f32 %v1218, %v1247
      %v1253 = vmul.f32 %v1219, %v1247
      %v1254 = vmul.f32 %v1220, %v1247
      %v1255 = vmul.f32 %v1221, %v1247
      %v1256 = vmul.f32 %v1222, %v1247
      %v1257 = vmul.f32 %v1223, %v1247
      %v1258 = vmul.f32 %v1224, %v1247
      %v1259 = vmul.f32 %v1225, %v1247
      %v1260 = vmul.f32 %v1226, %v1247
      %v1261 = vmul.f32 %v1227, %v1247
      %v1262 = vmul.f32 %v1228, %v1247
      %v1263 = vmul.f32 %v1229, %v1247
      %v1264 = vmul.f32 %v1230, %v1247
      %v1265 = vmul.f32 %v1231, %v1247
      %v1266 = vmul.f32 %v1232, %v1247
      %v1267 = vmul.f32 %v1233, %v1247
      %v1268 = vmul.f32 %v1234, %v1247
      %v1269 = vmul.f32 %v1235, %v1247
      %v1270 = vmul.f32 %v1236, %v1247
      %v1271 = vmul.f32 %v1237, %v1247
      %v1272 = vmul.f32 %v1238, %v1247
      %v1273 = vmul.f32 %v1239, %v1247
      %v1274 = vmul.f32 %v1240, %v1247
      %v1275 = vmul.f32 %v1241, %v1247
      %v1276 = vmul.f32 %v1242, %v1247
      %v1277 = vmul.f32 %v1243, %v1247
      %v1278 = vmul.f32 %v1244, %v1247
      %v1279 = vmul.f32 %v1245, %v1247
      %v1280 = vadd.f32 %v1182, %v1248
      %v1281 = vadd.f32 %v1183, %v1249
      %v1282 = vadd.f32 %v1184, %v1250
      %v1283 = vadd.f32 %v1185, %v1251
      %v1284 = vadd.f32 %v1186, %v1252
      %v1285 = vadd.f32 %v1187, %v1253
      %v1286 = vadd.f32 %v1188, %v1254
      %v1287 = vadd.f32 %v1189, %v1255
      %v1288 = vadd.f32 %v1190, %v1256
      %v1289 = vadd.f32 %v1191, %v1257
      %v1290 = vadd.f32 %v1192, %v1258
      %v1291 = vadd.f32 %v1193, %v1259
      %v1292 = vadd.f32 %v1194, %v1260
      %v1293 = vadd.f32 %v1195, %v1261
      %v1294 = vadd.f32 %v1196, %v1262
      %v1295 = vadd.f32 %v1197, %v1263
      %v1296 = vadd.f32 %v1198, %v1264
      %v1297 = vadd.f32 %v1199, %v1265
      %v1298 = vadd.f32 %v1200, %v1266
      %v1299 = vadd.f32 %v1201, %v1267
      %v1300 = vadd.f32 %v1202, %v1268
      %v1301 = vadd.f32 %v1203, %v1269
      %v1302 = vadd.f32 %v1204, %v1270
      %v1303 = vadd.f32 %v1205, %v1271
      %v1304 = vadd.f32 %v1206, %v1272
      %v1305 = vadd.f32 %v1207, %v1273
      %v1306 = vadd.f32 %v1208, %v1274
      %v1307 = vadd.f32 %v1209, %v1275
      %v1308 = vadd.f32 %v1210, %v1276
      %v1309 = vadd.f32 %v1211, %v1277
      %v1310 = vadd.f32 %v1212, %v1278
      %v1311 = vadd.f32 %v1213, %v1279
      %v1312 = vld [vmem:[%s789 + $0x2] sm:$0xff]
      %v1313 = vld [vmem:[%s789 + $0xa] sm:$0xff]
      %v1314 = vld [vmem:[%s789 + $0x1a] sm:$0xff]
      %v1315 = vld [vmem:[%s789 + $0x22] sm:$0xff]
      %v1316 = vld [vmem:[%s789 + $0x32] sm:$0xff]
      %v1317 = vld [vmem:[%s789 + $0x3a] sm:$0xff]
      %v1318 = vld [vmem:[%s789 + $0x4a] sm:$0xff]
      %v1319 = vld [vmem:[%s789 + $0x52] sm:$0xff]
      %v1320 = vld [vmem:[%s789 + $0x62] sm:$0xff]
      %v1321 = vld [vmem:[%s789 + $0x6a] sm:$0xff]
      %v1322 = vld [vmem:[%s789 + $0x7a] sm:$0xff]
      %v1323 = vld [vmem:[%s789 + $0x82] sm:$0xff]
      %v1324 = vld [vmem:[%s789 + $0x92] sm:$0xff]
      %v1325 = vld [vmem:[%s789 + $0x9a] sm:$0xff]
      %v1326 = vld [vmem:[%s789 + $0xaa] sm:$0xff]
      %v1327 = vld [vmem:[%s789 + $0xb2] sm:$0xff]
      %v1328 = vld [vmem:[%s789 + $0xc2] sm:$0xff]
      %v1329 = vld [vmem:[%s789 + $0xca] sm:$0xff]
      %v1330 = vld [vmem:[%s789 + $0xda] sm:$0xff]
      %v1331 = vld [vmem:[%s789 + $0xe2] sm:$0xff]
      %v1332 = vld [vmem:[%s789 + $0xf2] sm:$0xff]
      %v1333 = vld [vmem:[%s789 + $0xfa] sm:$0xff]
      %v1334 = vld [vmem:[%s789 + $0x10a] sm:$0xff]
      %v1335 = vld [vmem:[%s789 + $0x112] sm:$0xff]
      %v1336 = vld [vmem:[%s789 + $0x122] sm:$0xff]
      %v1337 = vld [vmem:[%s789 + $0x12a] sm:$0xff]
      %v1338 = vld [vmem:[%s789 + $0x13a] sm:$0xff]
      %v1339 = vld [vmem:[%s789 + $0x142] sm:$0xff]
      %v1340 = vld [vmem:[%s789 + $0x152] sm:$0xff]
      %v1341 = vld [vmem:[%s789 + $0x15a] sm:$0xff]
      %v1342 = vld [vmem:[%s789 + $0x16a] sm:$0xff]
      %v1343 = vld [vmem:[%s789 + $0x172] sm:$0xff]
      %v1344 = vld [vmem:[%s2 + $0x5] sm:$0x1]
      %v1345 = vperm.slane %v1344, 0
      %v1346 = vmul.f32 %v1312, %v1345
      %v1347 = vmul.f32 %v1313, %v1345
      %v1348 = vmul.f32 %v1314, %v1345
      %v1349 = vmul.f32 %v1315, %v1345
      %v1350 = vmul.f32 %v1316, %v1345
      %v1351 = vmul.f32 %v1317, %v1345
      %v1352 = vmul.f32 %v1318, %v1345
      %v1353 = vmul.f32 %v1319, %v1345
      %v1354 = vmul.f32 %v1320, %v1345
      %v1355 = vmul.f32 %v1321, %v1345
      %v1356 = vmul.f32 %v1322, %v1345
      %v1357 = vmul.f32 %v1323, %v1345
      %v1358 = vmul.f32 %v1324, %v1345
      %v1359 = vmul.f32 %v1325, %v1345
      %v1360 = vmul.f32 %v1326, %v1345
      %v1361 = vmul.f32 %v1327, %v1345
      %v1362 = vmul.f32 %v1328, %v1345
      %v1363 = vmul.f32 %v1329, %v1345
      %v1364 = vmul.f32 %v1330, %v1345
      %v1365 = vmul.f32 %v1331, %v1345
      %v1366 = vmul.f32 %v1332, %v1345
      %v1367 = vmul.f32 %v1333, %v1345
      %v1368 = vmul.f32 %v1334, %v1345
      %v1369 = vmul.f32 %v1335, %v1345
      %v1370 = vmul.f32 %v1336, %v1345
      %v1371 = vmul.f32 %v1337, %v1345
      %v1372 = vmul.f32 %v1338, %v1345
      %v1373 = vmul.f32 %v1339, %v1345
      %v1374 = vmul.f32 %v1340, %v1345
      %v1375 = vmul.f32 %v1341, %v1345
      %v1376 = vmul.f32 %v1342, %v1345
      %v1377 = vmul.f32 %v1343, %v1345
      %v1378 = vadd.f32 %v1280, %v1346
      %v1379 = vadd.f32 %v1281, %v1347
      %v1380 = vadd.f32 %v1282, %v1348
      %v1381 = vadd.f32 %v1283, %v1349
      %v1382 = vadd.f32 %v1284, %v1350
      %v1383 = vadd.f32 %v1285, %v1351
      %v1384 = vadd.f32 %v1286, %v1352
      %v1385 = vadd.f32 %v1287, %v1353
      %v1386 = vadd.f32 %v1288, %v1354
      %v1387 = vadd.f32 %v1289, %v1355
      %v1388 = vadd.f32 %v1290, %v1356
      %v1389 = vadd.f32 %v1291, %v1357
      %v1390 = vadd.f32 %v1292, %v1358
      %v1391 = vadd.f32 %v1293, %v1359
      %v1392 = vadd.f32 %v1294, %v1360
      %v1393 = vadd.f32 %v1295, %v1361
      %v1394 = vadd.f32 %v1296, %v1362
      %v1395 = vadd.f32 %v1297, %v1363
      %v1396 = vadd.f32 %v1298, %v1364
      %v1397 = vadd.f32 %v1299, %v1365
      %v1398 = vadd.f32 %v1300, %v1366
      %v1399 = vadd.f32 %v1301, %v1367
      %v1400 = vadd.f32 %v1302, %v1368
      %v1401 = vadd.f32 %v1303, %v1369
      %v1402 = vadd.f32 %v1304, %v1370
      %v1403 = vadd.f32 %v1305, %v1371
      %v1404 = vadd.f32 %v1306, %v1372
      %v1405 = vadd.f32 %v1307, %v1373
      %v1406 = vadd.f32 %v1308, %v1374
      %v1407 = vadd.f32 %v1309, %v1375
      %v1408 = vadd.f32 %v1310, %v1376
      %v1409 = vadd.f32 %v1311, %v1377
      %s1410 = scalar_lea.vmem [#allocation2], 48
      %v1411 = vld [vmem:[%s1410] sm:$0xff]
      %v1412 = vld [vmem:[%s1410 + $0x8] sm:$0xff]
      %v1413 = vld [vmem:[%s1410 + $0x18] sm:$0xff]
      %v1414 = vld [vmem:[%s1410 + $0x20] sm:$0xff]
      %v1415 = vld [vmem:[%s1410 + $0x30] sm:$0xff]
      %v1416 = vld [vmem:[%s1410 + $0x38] sm:$0xff]
      %v1417 = vld [vmem:[%s1410 + $0x48] sm:$0xff]
      %v1418 = vld [vmem:[%s1410 + $0x50] sm:$0xff]
      %v1419 = vld [vmem:[%s1410 + $0x60] sm:$0xff]
      %v1420 = vld [vmem:[%s1410 + $0x68] sm:$0xff]
      %v1421 = vld [vmem:[%s1410 + $0x78] sm:$0xff]
      %v1422 = vld [vmem:[%s1410 + $0x80] sm:$0xff]
      %v1423 = vld [vmem:[%s1410 + $0x90] sm:$0xff]
      %v1424 = vld [vmem:[%s1410 + $0x98] sm:$0xff]
      %v1425 = vld [vmem:[%s1410 + $0xa8] sm:$0xff]
      %v1426 = vld [vmem:[%s1410 + $0xb0] sm:$0xff]
      %v1427 = vld [vmem:[%s1410 + $0xc0] sm:$0xff]
      %v1428 = vld [vmem:[%s1410 + $0xc8] sm:$0xff]
      %v1429 = vld [vmem:[%s1410 + $0xd8] sm:$0xff]
      %v1430 = vld [vmem:[%s1410 + $0xe0] sm:$0xff]
      %v1431 = vld [vmem:[%s1410 + $0xf0] sm:$0xff]
      %v1432 = vld [vmem:[%s1410 + $0xf8] sm:$0xff]
      %v1433 = vld [vmem:[%s1410 + $0x108] sm:$0xff]
      %v1434 = vld [vmem:[%s1410 + $0x110] sm:$0xff]
      %v1435 = vld [vmem:[%s1410 + $0x120] sm:$0xff]
      %v1436 = vld [vmem:[%s1410 + $0x128] sm:$0xff]
      %v1437 = vld [vmem:[%s1410 + $0x138] sm:$0xff]
      %v1438 = vld [vmem:[%s1410 + $0x140] sm:$0xff]
      %v1439 = vld [vmem:[%s1410 + $0x150] sm:$0xff]
      %v1440 = vld [vmem:[%s1410 + $0x158] sm:$0xff]
      %v1441 = vld [vmem:[%s1410 + $0x168] sm:$0xff]
      %v1442 = vld [vmem:[%s1410 + $0x170] sm:$0xff]
      %v1443 = vld [vmem:[%s2 + $0x6] sm:$0x1]
      %v1444 = vperm.slane %v1443, 0
      %v1445 = vmul.f32 %v1411, %v1444
      %v1446 = vmul.f32 %v1412, %v1444
      %v1447 = vmul.f32 %v1413, %v1444
      %v1448 = vmul.f32 %v1414, %v1444
      %v1449 = vmul.f32 %v1415, %v1444
      %v1450 = vmul.f32 %v1416, %v1444
      %v1451 = vmul.f32 %v1417, %v1444
      %v1452 = vmul.f32 %v1418, %v1444
      %v1453 = vmul.f32 %v1419, %v1444
      %v1454 = vmul.f32 %v1420, %v1444
      %v1455 = vmul.f32 %v1421, %v1444
      %v1456 = vmul.f32 %v1422, %v1444
      %v1457 = vmul.f32 %v1423, %v1444
      %v1458 = vmul.f32 %v1424, %v1444
      %v1459 = vmul.f32 %v1425, %v1444
      %v1460 = vmul.f32 %v1426, %v1444
      %v1461 = vmul.f32 %v1427, %v1444
      %v1462 = vmul.f32 %v1428, %v1444
      %v1463 = vmul.f32 %v1429, %v1444
      %v1464 = vmul.f32 %v1430, %v1444
      %v1465 = vmul.f32 %v1431, %v1444
      %v1466 = vmul.f32 %v1432, %v1444
      %v1467 = vmul.f32 %v1433, %v1444
      %v1468 = vmul.f32 %v1434, %v1444
      %v1469 = vmul.f32 %v1435, %v1444
      %v1470 = vmul.f32 %v1436, %v1444
      %v1471 = vmul.f32 %v1437, %v1444
      %v1472 = vmul.f32 %v1438, %v1444
      %v1473 = vmul.f32 %v1439, %v1444
      %v1474 = vmul.f32 %v1440, %v1444
      %v1475 = vmul.f32 %v1441, %v1444
      %v1476 = vmul.f32 %v1442, %v1444
      %v1477 = vadd.f32 %v1378, %v1445
      %v1478 = vadd.f32 %v1379, %v1446
      %v1479 = vadd.f32 %v1380, %v1447
      %v1480 = vadd.f32 %v1381, %v1448
      %v1481 = vadd.f32 %v1382, %v1449
      %v1482 = vadd.f32 %v1383, %v1450
      %v1483 = vadd.f32 %v1384, %v1451
      %v1484 = vadd.f32 %v1385, %v1452
      %v1485 = vadd.f32 %v1386, %v1453
      %v1486 = vadd.f32 %v1387, %v1454
      %v1487 = vadd.f32 %v1388, %v1455
      %v1488 = vadd.f32 %v1389, %v1456
      %v1489 = vadd.f32 %v1390, %v1457
      %v1490 = vadd.f32 %v1391, %v1458
      %v1491 = vadd.f32 %v1392, %v1459
      %v1492 = vadd.f32 %v1393, %v1460
      %v1493 = vadd.f32 %v1394, %v1461
      %v1494 = vadd.f32 %v1395, %v1462
      %v1495 = vadd.f32 %v1396, %v1463
      %v1496 = vadd.f32 %v1397, %v1464
      %v1497 = vadd.f32 %v1398, %v1465
      %v1498 = vadd.f32 %v1399, %v1466
      %v1499 = vadd.f32 %v1400, %v1467
      %v1500 = vadd.f32 %v1401, %v1468
      %v1501 = vadd.f32 %v1402, %v1469
      %v1502 = vadd.f32 %v1403, %v1470
      %v1503 = vadd.f32 %v1404, %v1471
      %v1504 = vadd.f32 %v1405, %v1472
      %v1505 = vadd.f32 %v1406, %v1473
      %v1506 = vadd.f32 %v1407, %v1474
      %v1507 = vadd.f32 %v1408, %v1475
      %v1508 = vadd.f32 %v1409, %v1476
      %v1509 = vld [vmem:[%s1410 + $0x1] sm:$0xff]
      %v1510 = vld [vmem:[%s1410 + $0x9] sm:$0xff]
      %v1511 = vld [vmem:[%s1410 + $0x19] sm:$0xff]
      %v1512 = vld [vmem:[%s1410 + $0x21] sm:$0xff]
      %v1513 = vld [vmem:[%s1410 + $0x31] sm:$0xff]
      %v1514 = vld [vmem:[%s1410 + $0x39] sm:$0xff]
      %v1515 = vld [vmem:[%s1410 + $0x49] sm:$0xff]
      %v1516 = vld [vmem:[%s1410 + $0x51] sm:$0xff]
      %v1517 = vld [vmem:[%s1410 + $0x61] sm:$0xff]
      %v1518 = vld [vmem:[%s1410 + $0x69] sm:$0xff]
      %v1519 = vld [vmem:[%s1410 + $0x79] sm:$0xff]
      %v1520 = vld [vmem:[%s1410 + $0x81] sm:$0xff]
      %v1521 = vld [vmem:[%s1410 + $0x91] sm:$0xff]
      %v1522 = vld [vmem:[%s1410 + $0x99] sm:$0xff]
      %v1523 = vld [vmem:[%s1410 + $0xa9] sm:$0xff]
      %v1524 = vld [vmem:[%s1410 + $0xb1] sm:$0xff]
      %v1525 = vld [vmem:[%s1410 + $0xc1] sm:$0xff]
      %v1526 = vld [vmem:[%s1410 + $0xc9] sm:$0xff]
      %v1527 = vld [vmem:[%s1410 + $0xd9] sm:$0xff]
      %v1528 = vld [vmem:[%s1410 + $0xe1] sm:$0xff]
      %v1529 = vld [vmem:[%s1410 + $0xf1] sm:$0xff]
      %v1530 = vld [vmem:[%s1410 + $0xf9] sm:$0xff]
      %v1531 = vld [vmem:[%s1410 + $0x109] sm:$0xff]
      %v1532 = vld [vmem:[%s1410 + $0x111] sm:$0xff]
      %v1533 = vld [vmem:[%s1410 + $0x121] sm:$0xff]
      %v1534 = vld [vmem:[%s1410 + $0x129] sm:$0xff]
      %v1535 = vld [vmem:[%s1410 + $0x139] sm:$0xff]
      %v1536 = vld [vmem:[%s1410 + $0x141] sm:$0xff]
      %v1537 = vld [vmem:[%s1410 + $0x151] sm:$0xff]
      %v1538 = vld [vmem:[%s1410 + $0x159] sm:$0xff]
      %v1539 = vld [vmem:[%s1410 + $0x169] sm:$0xff]
      %v1540 = vld [vmem:[%s1410 + $0x171] sm:$0xff]
      %v1541 = vld [vmem:[%s2 + $0x7] sm:$0x1]
      %v1542 = vperm.slane %v1541, 0
      %v1543 = vmul.f32 %v1509, %v1542
      %v1544 = vmul.f32 %v1510, %v1542
      %v1545 = vmul.f32 %v1511, %v1542
      %v1546 = vmul.f32 %v1512, %v1542
      %v1547 = vmul.f32 %v1513, %v1542
      %v1548 = vmul.f32 %v1514, %v1542
      %v1549 = vmul.f32 %v1515, %v1542
      %v1550 = vmul.f32 %v1516, %v1542
      %v1551 = vmul.f32 %v1517, %v1542
      %v1552 = vmul.f32 %v1518, %v1542
      %v1553 = vmul.f32 %v1519, %v1542
      %v1554 = vmul.f32 %v1520, %v1542
      %v1555 = vmul.f32 %v1521, %v1542
      %v1556 = vmul.f32 %v1522, %v1542
      %v1557 = vmul.f32 %v1523, %v1542
      %v1558 = vmul.f32 %v1524, %v1542
      %v1559 = vmul.f32 %v1525, %v1542
      %v1560 = vmul.f32 %v1526, %v1542
      %v1561 = vmul.f32 %v1527, %v1542
      %v1562 = vmul.f32 %v1528, %v1542
      %v1563 = vmul.f32 %v1529, %v1542
      %v1564 = vmul.f32 %v1530, %v1542
      %v1565 = vmul.f32 %v1531, %v1542
      %v1566 = vmul.f32 %v1532, %v1542
      %v1567 = vmul.f32 %v1533, %v1542
      %v1568 = vmul.f32 %v1534, %v1542
      %v1569 = vmul.f32 %v1535, %v1542
      %v1570 = vmul.f32 %v1536, %v1542
      %v1571 = vmul.f32 %v1537, %v1542
      %v1572 = vmul.f32 %v1538, %v1542
      %v1573 = vmul.f32 %v1539, %v1542
      %v1574 = vmul.f32 %v1540, %v1542
      %v1575 = vadd.f32 %v1477, %v1543
      %v1576 = vadd.f32 %v1478, %v1544
      %v1577 = vadd.f32 %v1479, %v1545
      %v1578 = vadd.f32 %v1480, %v1546
      %v1579 = vadd.f32 %v1481, %v1547
      %v1580 = vadd.f32 %v1482, %v1548
      %v1581 = vadd.f32 %v1483, %v1549
      %v1582 = vadd.f32 %v1484, %v1550
      %v1583 = vadd.f32 %v1485, %v1551
      %v1584 = vadd.f32 %v1486, %v1552
      %v1585 = vadd.f32 %v1487, %v1553
      %v1586 = vadd.f32 %v1488, %v1554
      %v1587 = vadd.f32 %v1489, %v1555
      %v1588 = vadd.f32 %v1490, %v1556
      %v1589 = vadd.f32 %v1491, %v1557
      %v1590 = vadd.f32 %v1492, %v1558
      %v1591 = vadd.f32 %v1493, %v1559
      %v1592 = vadd.f32 %v1494, %v1560
      %v1593 = vadd.f32 %v1495, %v1561
      %v1594 = vadd.f32 %v1496, %v1562
      %v1595 = vadd.f32 %v1497, %v1563
      %v1596 = vadd.f32 %v1498, %v1564
      %v1597 = vadd.f32 %v1499, %v1565
      %v1598 = vadd.f32 %v1500, %v1566
      %v1599 = vadd.f32 %v1501, %v1567
      %v1600 = vadd.f32 %v1502, %v1568
      %v1601 = vadd.f32 %v1503, %v1569
      %v1602 = vadd.f32 %v1504, %v1570
      %v1603 = vadd.f32 %v1505, %v1571
      %v1604 = vadd.f32 %v1506, %v1572
      %v1605 = vadd.f32 %v1507, %v1573
      %v1606 = vadd.f32 %v1508, %v1574
      %v1607 = vld [vmem:[%s1410 + $0x2] sm:$0xff]
      %v1608 = vld [vmem:[%s1410 + $0xa] sm:$0xff]
      %v1609 = vld [vmem:[%s1410 + $0x1a] sm:$0xff]
      %v1610 = vld [vmem:[%s1410 + $0x22] sm:$0xff]
      %v1611 = vld [vmem:[%s1410 + $0x32] sm:$0xff]
      %v1612 = vld [vmem:[%s1410 + $0x3a] sm:$0xff]
      %v1613 = vld [vmem:[%s1410 + $0x4a] sm:$0xff]
      %v1614 = vld [vmem:[%s1410 + $0x52] sm:$0xff]
      %v1615 = vld [vmem:[%s1410 + $0x62] sm:$0xff]
      %v1616 = vld [vmem:[%s1410 + $0x6a] sm:$0xff]
      %v1617 = vld [vmem:[%s1410 + $0x7a] sm:$0xff]
      %v1618 = vld [vmem:[%s1410 + $0x82] sm:$0xff]
      %v1619 = vld [vmem:[%s1410 + $0x92] sm:$0xff]
      %v1620 = vld [vmem:[%s1410 + $0x9a] sm:$0xff]
      %v1621 = vld [vmem:[%s1410 + $0xaa] sm:$0xff]
      %v1622 = vld [vmem:[%s1410 + $0xb2] sm:$0xff]
      %v1623 = vld [vmem:[%s1410 + $0xc2] sm:$0xff]
      %v1624 = vld [vmem:[%s1410 + $0xca] sm:$0xff]
      %v1625 = vld [vmem:[%s1410 + $0xda] sm:$0xff]
      %v1626 = vld [vmem:[%s1410 + $0xe2] sm:$0xff]
      %v1627 = vld [vmem:[%s1410 + $0xf2] sm:$0xff]
      %v1628 = vld [vmem:[%s1410 + $0xfa] sm:$0xff]
      %v1629 = vld [vmem:[%s1410 + $0x10a] sm:$0xff]
      %v1630 = vld [vmem:[%s1410 + $0x112] sm:$0xff]
      %v1631 = vld [vmem:[%s1410 + $0x122] sm:$0xff]
      %v1632 = vld [vmem:[%s1410 + $0x12a] sm:$0xff]
      %v1633 = vld [vmem:[%s1410 + $0x13a] sm:$0xff]
      %v1634 = vld [vmem:[%s1410 + $0x142] sm:$0xff]
      %v1635 = vld [vmem:[%s1410 + $0x152] sm:$0xff]
      %v1636 = vld [vmem:[%s1410 + $0x15a] sm:$0xff]
      %v1637 = vld [vmem:[%s1410 + $0x16a] sm:$0xff]
      %v1638 = vld [vmem:[%s1410 + $0x172] sm:$0xff]
      %v1639 = vld [vmem:[%s2 + $0x8] sm:$0x1]
      %v1640 = vperm.slane %v1639, 0
      %v1641 = vmul.f32 %v1607, %v1640
      %v1642 = vmul.f32 %v1608, %v1640
      %v1643 = vmul.f32 %v1609, %v1640
      %v1644 = vmul.f32 %v1610, %v1640
      %v1645 = vmul.f32 %v1611, %v1640
      %v1646 = vmul.f32 %v1612, %v1640
      %v1647 = vmul.f32 %v1613, %v1640
      %v1648 = vmul.f32 %v1614, %v1640
      %v1649 = vmul.f32 %v1615, %v1640
      %v1650 = vmul.f32 %v1616, %v1640
      %v1651 = vmul.f32 %v1617, %v1640
      %v1652 = vmul.f32 %v1618, %v1640
      %v1653 = vmul.f32 %v1619, %v1640
      %v1654 = vmul.f32 %v1620, %v1640
      %v1655 = vmul.f32 %v1621, %v1640
      %v1656 = vmul.f32 %v1622, %v1640
      %v1657 = vmul.f32 %v1623, %v1640
      %v1658 = vmul.f32 %v1624, %v1640
      %v1659 = vmul.f32 %v1625, %v1640
      %v1660 = vmul.f32 %v1626, %v1640
      %v1661 = vmul.f32 %v1627, %v1640
      %v1662 = vmul.f32 %v1628, %v1640
      %v1663 = vmul.f32 %v1629, %v1640
      %v1664 = vmul.f32 %v1630, %v1640
      %v1665 = vmul.f32 %v1631, %v1640
      %v1666 = vmul.f32 %v1632, %v1640
      %v1667 = vmul.f32 %v1633, %v1640
      %v1668 = vmul.f32 %v1634, %v1640
      %v1669 = vmul.f32 %v1635, %v1640
      %v1670 = vmul.f32 %v1636, %v1640
      %v1671 = vmul.f32 %v1637, %v1640
      %v1672 = vmul.f32 %v1638, %v1640
      %v1673 = vadd.f32 %v1575, %v1641
      %v1674 = vadd.f32 %v1576, %v1642
      %v1675 = vadd.f32 %v1577, %v1643
      %v1676 = vadd.f32 %v1578, %v1644
      %v1677 = vadd.f32 %v1579, %v1645
      %v1678 = vadd.f32 %v1580, %v1646
      %v1679 = vadd.f32 %v1581, %v1647
      %v1680 = vadd.f32 %v1582, %v1648
      %v1681 = vadd.f32 %v1583, %v1649
      %v1682 = vadd.f32 %v1584, %v1650
      %v1683 = vadd.f32 %v1585, %v1651
      %v1684 = vadd.f32 %v1586, %v1652
      %v1685 = vadd.f32 %v1587, %v1653
      %v1686 = vadd.f32 %v1588, %v1654
      %v1687 = vadd.f32 %v1589, %v1655
      %v1688 = vadd.f32 %v1590, %v1656
      %v1689 = vadd.f32 %v1591, %v1657
      %v1690 = vadd.f32 %v1592, %v1658
      %v1691 = vadd.f32 %v1593, %v1659
      %v1692 = vadd.f32 %v1594, %v1660
      %v1693 = vadd.f32 %v1595, %v1661
      %v1694 = vadd.f32 %v1596, %v1662
      %v1695 = vadd.f32 %v1597, %v1663
      %v1696 = vadd.f32 %v1598, %v1664
      %v1697 = vadd.f32 %v1599, %v1665
      %v1698 = vadd.f32 %v1600, %v1666
      %v1699 = vadd.f32 %v1601, %v1667
      %v1700 = vadd.f32 %v1602, %v1668
      %v1701 = vadd.f32 %v1603, %v1669
      %v1702 = vadd.f32 %v1604, %v1670
      %v1703 = vadd.f32 %v1605, %v1671
      %v1704 = vadd.f32 %v1606, %v1672
      %v1705 = vmul.f32 %v1673, 0.5
      %v1706 = vmul.f32 %v1674, 0.5
      %v1707 = vmul.f32 %v1675, 0.5
      %v1708 = vmul.f32 %v1676, 0.5
      %v1709 = vmul.f32 %v1677, 0.5
      %v1710 = vmul.f32 %v1678, 0.5
      %v1711 = vmul.f32 %v1679, 0.5
      %v1712 = vmul.f32 %v1680, 0.5
      %v1713 = vmul.f32 %v1681, 0.5
      %v1714 = vmul.f32 %v1682, 0.5
      %v1715 = vmul.f32 %v1683, 0.5
      %v1716 = vmul.f32 %v1684, 0.5
      %v1717 = vmul.f32 %v1685, 0.5
      %v1718 = vmul.f32 %v1686, 0.5
      %v1719 = vmul.f32 %v1687, 0.5
      %v1720 = vmul.f32 %v1688, 0.5
      %v1721 = vmul.f32 %v1689, 0.5
      %v1722 = vmul.f32 %v1690, 0.5
      %v1723 = vmul.f32 %v1691, 0.5
      %v1724 = vmul.f32 %v1692, 0.5
      %v1725 = vmul.f32 %v1693, 0.5
      %v1726 = vmul.f32 %v1694, 0.5
      %v1727 = vmul.f32 %v1695, 0.5
      %v1728 = vmul.f32 %v1696, 0.5
      %v1729 = vmul.f32 %v1697, 0.5
      %v1730 = vmul.f32 %v1698, 0.5
      %v1731 = vmul.f32 %v1699, 0.5
      %v1732 = vmul.f32 %v1700, 0.5
      %v1733 = vmul.f32 %v1701, 0.5
      %v1734 = vmul.f32 %v1702, 0.5
      %v1735 = vmul.f32 %v1703, 0.5
      %v1736 = vmul.f32 %v1704, 0.5
      %v1737 = vmul.f32 %v1673, %v1673
      %v1738 = vmul.f32 %v1674, %v1674
      %v1739 = vmul.f32 %v1675, %v1675
      %v1740 = vmul.f32 %v1676, %v1676
      %v1741 = vmul.f32 %v1677, %v1677
      %v1742 = vmul.f32 %v1678, %v1678
      %v1743 = vmul.f32 %v1679, %v1679
      %v1744 = vmul.f32 %v1680, %v1680
      %v1745 = vmul.f32 %v1681, %v1681
      %v1746 = vmul.f32 %v1682, %v1682
      %v1747 = vmul.f32 %v1683, %v1683
      %v1748 = vmul.f32 %v1684, %v1684
      %v1749 = vmul.f32 %v1685, %v1685
      %v1750 = vmul.f32 %v1686, %v1686
      %v1751 = vmul.f32 %v1687, %v1687
      %v1752 = vmul.f32 %v1688, %v1688
      %v1753 = vmul.f32 %v1689, %v1689
      %v1754 = vmul.f32 %v1690, %v1690
      %v1755 = vmul.f32 %v1691, %v1691
      %v1756 = vmul.f32 %v1692, %v1692
      %v1757 = vmul.f32 %v1693, %v1693
      %v1758 = vmul.f32 %v1694, %v1694
      %v1759 = vmul.f32 %v1695, %v1695
      %v1760 = vmul.f32 %v1696, %v1696
      %v1761 = vmul.f32 %v1697, %v1697
      %v1762 = vmul.f32 %v1698, %v1698
      %v1763 = vmul.f32 %v1699, %v1699
      %v1764 = vmul.f32 %v1700, %v1700
      %v1765 = vmul.f32 %v1701, %v1701
      %v1766 = vmul.f32 %v1702, %v1702
      %v1767 = vmul.f32 %v1703, %v1703
      %v1768 = vmul.f32 %v1704, %v1704
      %v1769 = vmul.f32 %v1737, %v1673
      %v1770 = vmul.f32 %v1738, %v1674
      %v1771 = vmul.f32 %v1739, %v1675
      %v1772 = vmul.f32 %v1740, %v1676
      %v1773 = vmul.f32 %v1741, %v1677
      %v1774 = vmul.f32 %v1742, %v1678
      %v1775 = vmul.f32 %v1743, %v1679
      %v1776 = vmul.f32 %v1744, %v1680
      %v1777 = vmul.f32 %v1745, %v1681
      %v1778 = vmul.f32 %v1746, %v1682
      %v1779 = vmul.f32 %v1747, %v1683
      %v1780 = vmul.f32 %v1748, %v1684
      %v1781 = vmul.f32 %v1749, %v1685
      %v1782 = vmul.f32 %v1750, %v1686
      %v1783 = vmul.f32 %v1751, %v1687
      %v1784 = vmul.f32 %v1752, %v1688
      %v1785 = vmul.f32 %v1753, %v1689
      %v1786 = vmul.f32 %v1754, %v1690
      %v1787 = vmul.f32 %v1755, %v1691
      %v1788 = vmul.f32 %v1756, %v1692
      %v1789 = vmul.f32 %v1757, %v1693
      %v1790 = vmul.f32 %v1758, %v1694
      %v1791 = vmul.f32 %v1759, %v1695
      %v1792 = vmul.f32 %v1760, %v1696
      %v1793 = vmul.f32 %v1761, %v1697
      %v1794 = vmul.f32 %v1762, %v1698
      %v1795 = vmul.f32 %v1763, %v1699
      %v1796 = vmul.f32 %v1764, %v1700
      %v1797 = vmul.f32 %v1765, %v1701
      %v1798 = vmul.f32 %v1766, %v1702
      %v1799 = vmul.f32 %v1767, %v1703
      %v1800 = vmul.f32 %v1768, %v1704
      %v1801 = vmul.f32 %v1769, 0.044715
      %v1802 = vmul.f32 %v1770, 0.044715
      %v1803 = vmul.f32 %v1771, 0.044715
      %v1804 = vmul.f32 %v1772, 0.044715
      %v1805 = vmul.f32 %v1773, 0.044715
      %v1806 = vmul.f32 %v1774, 0.044715
      %v1807 = vmul.f32 %v1775, 0.044715
      %v1808 = vmul.f32 %v1776, 0.044715
      %v1809 = vmul.f32 %v1777, 0.044715
      %v1810 = vmul.f32 %v1778, 0.044715
      %v1811 = vmul.f32 %v1779, 0.044715
      %v1812 = vmul.f32 %v1780, 0.044715
      %v1813 = vmul.f32 %v1781, 0.044715
      %v1814 = vmul.f32 %v1782, 0.044715
      %v1815 = vmul.f32 %v1783, 0.044715
      %v1816 = vmul.f32 %v1784, 0.044715
      %v1817 = vmul.f32 %v1785, 0.044715
      %v1818 = vmul.f32 %v1786, 0.044715
      %v1819 = vmul.f32 %v1787, 0.044715
      %v1820 = vmul.f32 %v1788, 0.044715
      %v1821 = vmul.f32 %v1789, 0.044715
      %v1822 = vmul.f32 %v1790, 0.044715
      %v1823 = vmul.f32 %v1791, 0.044715
      %v1824 = vmul.f32 %v1792, 0.044715
      %v1825 = vmul.f32 %v1793, 0.044715
      %v1826 = vmul.f32 %v1794, 0.044715
      %v1827 = vmul.f32 %v1795, 0.044715
      %v1828 = vmul.f32 %v1796, 0.044715
      %v1829 = vmul.f32 %v1797, 0.044715
      %v1830 = vmul.f32 %v1798, 0.044715
      %v1831 = vmul.f32 %v1799, 0.044715
      %v1832 = vmul.f32 %v1800, 0.044715
      %v1833 = vadd.f32 %v1673, %v1801
      %v1834 = vadd.f32 %v1674, %v1802
      %v1835 = vadd.f32 %v1675, %v1803
      %v1836 = vadd.f32 %v1676, %v1804
      %v1837 = vadd.f32 %v1677, %v1805
      %v1838 = vadd.f32 %v1678, %v1806
      %v1839 = vadd.f32 %v1679, %v1807
      %v1840 = vadd.f32 %v1680, %v1808
      %v1841 = vadd.f32 %v1681, %v1809
      %v1842 = vadd.f32 %v1682, %v1810
      %v1843 = vadd.f32 %v1683, %v1811
      %v1844 = vadd.f32 %v1684, %v1812
      %v1845 = vadd.f32 %v1685, %v1813
      %v1846 = vadd.f32 %v1686, %v1814
      %v1847 = vadd.f32 %v1687, %v1815
      %v1848 = vadd.f32 %v1688, %v1816
      %v1849 = vadd.f32 %v1689, %v1817
      %v1850 = vadd.f32 %v1690, %v1818
      %v1851 = vadd.f32 %v1691, %v1819
      %v1852 = vadd.f32 %v1692, %v1820
      %v1853 = vadd.f32 %v1693, %v1821
      %v1854 = vadd.f32 %v1694, %v1822
      %v1855 = vadd.f32 %v1695, %v1823
      %v1856 = vadd.f32 %v1696, %v1824
      %v1857 = vadd.f32 %v1697, %v1825
      %v1858 = vadd.f32 %v1698, %v1826
      %v1859 = vadd.f32 %v1699, %v1827
      %v1860 = vadd.f32 %v1700, %v1828
      %v1861 = vadd.f32 %v1701, %v1829
      %v1862 = vadd.f32 %v1702, %v1830
      %v1863 = vadd.f32 %v1703, %v1831
      %v1864 = vadd.f32 %v1704, %v1832
      %v1865 = vmul.f32 %v1833, 0.7978846
      %v1866 = vmul.f32 %v1834, 0.7978846
      %v1867 = vmul.f32 %v1835, 0.7978846
      %v1868 = vmul.f32 %v1836, 0.7978846
      %v1869 = vmul.f32 %v1837, 0.7978846
      %v1870 = vmul.f32 %v1838, 0.7978846
      %v1871 = vmul.f32 %v1839, 0.7978846
      %v1872 = vmul.f32 %v1840, 0.7978846
      %v1873 = vmul.f32 %v1841, 0.7978846
      %v1874 = vmul.f32 %v1842, 0.7978846
      %v1875 = vmul.f32 %v1843, 0.7978846
      %v1876 = vmul.f32 %v1844, 0.7978846
      %v1877 = vmul.f32 %v1845, 0.7978846
      %v1878 = vmul.f32 %v1846, 0.7978846
      %v1879 = vmul.f32 %v1847, 0.7978846
      %v1880 = vmul.f32 %v1848, 0.7978846
      %v1881 = vmul.f32 %v1849, 0.7978846
      %v1882 = vmul.f32 %v1850, 0.7978846
      %v1883 = vmul.f32 %v1851, 0.7978846
      %v1884 = vmul.f32 %v1852, 0.7978846
      %v1885 = vmul.f32 %v1853, 0.7978846
      %v1886 = vmul.f32 %v1854, 0.7978846
      %v1887 = vmul.f32 %v1855, 0.7978846
      %v1888 = vmul.f32 %v1856, 0.7978846
      %v1889 = vmul.f32 %v1857, 0.7978846
      %v1890 = vmul.f32 %v1858, 0.7978846
      %v1891 = vmul.f32 %v1859, 0.7978846
      %v1892 = vmul.f32 %v1860, 0.7978846
      %v1893 = vmul.f32 %v1861, 0.7978846
      %v1894 = vmul.f32 %v1862, 0.7978846
      %v1895 = vmul.f32 %v1863, 0.7978846
      %v1896 = vmul.f32 %v1864, 0.7978846
      %v1897 = vtanh.pop %v1865
      %v1898 = vtanh.pop %v1866
      %v1899 = vtanh.pop %v1867
      %v1900 = vtanh.pop %v1868
      %v1901 = vtanh.pop %v1869
      %v1902 = vtanh.pop %v1870
      %v1903 = vtanh.pop %v1871
      %v1904 = vtanh.pop %v1872
      %v1905 = vtanh.pop %v1873
      %v1906 = vtanh.pop %v1874
      %v1907 = vtanh.pop %v1875
      %v1908 = vtanh.pop %v1876
      %v1909 = vtanh.pop %v1877
      %v1910 = vtanh.pop %v1878
      %v1911 = vtanh.pop %v1879
      %v1912 = vtanh.pop %v1880
      %v1913 = vtanh.pop %v1881
      %v1914 = vtanh.pop %v1882
      %v1915 = vtanh.pop %v1883
      %v1916 = vtanh.pop %v1884
      %v1917 = vtanh.pop %v1885
      %v1918 = vtanh.pop %v1886
      %v1919 = vtanh.pop %v1887
      %v1920 = vtanh.pop %v1888
      %v1921 = vtanh.pop %v1889
      %v1922 = vtanh.pop %v1890
      %v1923 = vtanh.pop %v1891
      %v1924 = vtanh.pop %v1892
      %v1925 = vtanh.pop %v1893
      %v1926 = vtanh.pop %v1894
      %v1927 = vtanh.pop %v1895
      %v1928 = vtanh.pop %v1896
      %v1929 = vadd.f32 %v1897, 1.0
      %v1930 = vadd.f32 %v1898, 1.0
      %v1931 = vadd.f32 %v1899, 1.0
      %v1932 = vadd.f32 %v1900, 1.0
      %v1933 = vadd.f32 %v1901, 1.0
      %v1934 = vadd.f32 %v1902, 1.0
      %v1935 = vadd.f32 %v1903, 1.0
      %v1936 = vadd.f32 %v1904, 1.0
      %v1937 = vadd.f32 %v1905, 1.0
      %v1938 = vadd.f32 %v1906, 1.0
      %v1939 = vadd.f32 %v1907, 1.0
      %v1940 = vadd.f32 %v1908, 1.0
      %v1941 = vadd.f32 %v1909, 1.0
      %v1942 = vadd.f32 %v1910, 1.0
      %v1943 = vadd.f32 %v1911, 1.0
      %v1944 = vadd.f32 %v1912, 1.0
      %v1945 = vadd.f32 %v1913, 1.0
      %v1946 = vadd.f32 %v1914, 1.0
      %v1947 = vadd.f32 %v1915, 1.0
      %v1948 = vadd.f32 %v1916, 1.0
      %v1949 = vadd.f32 %v1917, 1.0
      %v1950 = vadd.f32 %v1918, 1.0
      %v1951 = vadd.f32 %v1919, 1.0
      %v1952 = vadd.f32 %v1920, 1.0
      %v1953 = vadd.f32 %v1921, 1.0
      %v1954 = vadd.f32 %v1922, 1.0
      %v1955 = vadd.f32 %v1923, 1.0
      %v1956 = vadd.f32 %v1924, 1.0
      %v1957 = vadd.f32 %v1925, 1.0
      %v1958 = vadd.f32 %v1926, 1.0
      %v1959 = vadd.f32 %v1927, 1.0
      %v1960 = vadd.f32 %v1928, 1.0
      %v1961 = vmul.f32 %v1705, %v1929
      %v1962 = vmul.f32 %v1706, %v1930
      %v1963 = vmul.f32 %v1707, %v1931
      %v1964 = vmul.f32 %v1708, %v1932
      %v1965 = vmul.f32 %v1709, %v1933
      %v1966 = vmul.f32 %v1710, %v1934
      %v1967 = vmul.f32 %v1711, %v1935
      %v1968 = vmul.f32 %v1712, %v1936
      %v1969 = vmul.f32 %v1713, %v1937
      %v1970 = vmul.f32 %v1714, %v1938
      %v1971 = vmul.f32 %v1715, %v1939
      %v1972 = vmul.f32 %v1716, %v1940
      %v1973 = vmul.f32 %v1717, %v1941
      %v1974 = vmul.f32 %v1718, %v1942
      %v1975 = vmul.f32 %v1719, %v1943
      %v1976 = vmul.f32 %v1720, %v1944
      %v1977 = vmul.f32 %v1721, %v1945
      %v1978 = vmul.f32 %v1722, %v1946
      %v1979 = vmul.f32 %v1723, %v1947
      %v1980 = vmul.f32 %v1724, %v1948
      %v1981 = vmul.f32 %v1725, %v1949
      %v1982 = vmul.f32 %v1726, %v1950
      %v1983 = vmul.f32 %v1727, %v1951
      %v1984 = vmul.f32 %v1728, %v1952
      %v1985 = vmul.f32 %v1729, %v1953
      %v1986 = vmul.f32 %v1730, %v1954
      %v1987 = vmul.f32 %v1731, %v1955
      %v1988 = vmul.f32 %v1732, %v1956
      %v1989 = vmul.f32 %v1733, %v1957
      %v1990 = vmul.f32 %v1734, %v1958
      %v1991 = vmul.f32 %v1735, %v1959
      %v1992 = vmul.f32 %v1736, %v1960
      %v1993 = vld [vmem:[%s3] sm:$0xff]
      %v1994 = vld [vmem:[%s3 + $0x8] sm:$0xff]
      %v1996 = vsel %vm733, %v1961, 0
      %v1999 = vsel %vm733, %v1962, 0
      %v2002 = vsel %vm733, %v1963, 0
      %v2005 = vsel %vm733, %v1964, 0
      %v2008 = vsel %vm733, %v1965, 0
      %v2011 = vsel %vm733, %v1966, 0
      %v2014 = vsel %vm733, %v1967, 0
      %v2017 = vsel %vm733, %v1968, 0
      %v2020 = vsel %vm733, %v1969, 0
      %v2023 = vsel %vm733, %v1970, 0
      %v2026 = vsel %vm733, %v1971, 0
      %v2029 = vsel %vm733, %v1972, 0
      %v2032 = vsel %vm733, %v1973, 0
      %v2035 = vsel %vm733, %v1974, 0
      %v2038 = vsel %vm733, %v1975, 0
      %v2041 = vsel %vm733, %v1976, 0
      %v2044 = vsel %vm733, %v1977, 0
      %v2047 = vsel %vm733, %v1978, 0
      %v2050 = vsel %vm733, %v1979, 0
      %v2053 = vsel %vm733, %v1980, 0
      %v2056 = vsel %vm733, %v1981, 0
      %v2059 = vsel %vm733, %v1982, 0
      %v2062 = vsel %vm733, %v1983, 0
      %v2065 = vsel %vm733, %v1984, 0
      %v2068 = vsel %vm733, %v1985, 0
      %v2071 = vsel %vm733, %v1986, 0
      %v2074 = vsel %vm733, %v1987, 0
      %v2077 = vsel %vm733, %v1988, 0
      %v2080 = vsel %vm733, %v1989, 0
      %v2083 = vsel %vm733, %v1990, 0
      %v2086 = vsel %vm733, %v1991, 0
      %v2089 = vsel %vm733, %v1992, 0
      %2091 = vmatpush.msra.mxu0 0.0
      %2092 = vmatpush.msra.mxu0 0.0
      %2093 = vmatpush.msra.mxu0 0.0
      %2094 = vmatpush.msra.mxu0 0.0
      %2095 = vmatpush.msra.mxu0 0.0
      %2096 = vmatpush.msra.mxu0 0.0
      %2097 = vmatpush.msra.mxu0 0.0
      %2098 = vmatpush.msra.mxu0 0.0
      %2099 = vmatpush.msra.mxu0 0.0
      %2100 = vmatpush.msra.mxu0 0.0
      %2101 = vmatpush.msra.mxu0 0.0
      %2102 = vmatpush.msra.mxu0 0.0
      %2103 = vmatpush.msra.mxu0 0.0
      %2104 = vmatpush.msra.mxu0 0.0
      %2105 = vmatpush.msra.mxu0 %v1994
      %2106 = vmatpush.msra.mxu0 %v1993
      %2107 = vmatmul.f32.gmra.mxu0 %v1996
      %v2108 = vpop.f32.mrf.mxu0
      %v2109 = vadd.f32 0.0, %v2108
      %2110 = vmatmul.f32.gmra.mxu0 %v1999
      %v2111 = vpop.f32.mrf.mxu0
      %v2112 = vadd.f32 0.0, %v2111
      %2113 = vmatmul.f32.gmra.mxu0 %v2002
      %v2114 = vpop.f32.mrf.mxu0
      %v2115 = vadd.f32 0.0, %v2114
      %2116 = vmatmul.f32.gmra.mxu0 %v2005
      %v2117 = vpop.f32.mrf.mxu0
      %v2118 = vadd.f32 0.0, %v2117
      %2119 = vmatmul.f32.gmra.mxu0 %v2008
      %v2120 = vpop.f32.mrf.mxu0
      %v2121 = vadd.f32 0.0, %v2120
      %2122 = vmatmul.f32.gmra.mxu0 %v2011
      %v2123 = vpop.f32.mrf.mxu0
      %v2124 = vadd.f32 0.0, %v2123
      %2125 = vmatmul.f32.gmra.mxu0 %v2014
      %v2126 = vpop.f32.mrf.mxu0
      %v2127 = vadd.f32 0.0, %v2126
      %2128 = vmatmul.f32.gmra.mxu0 %v2017
      %v2129 = vpop.f32.mrf.mxu0
      %v2130 = vadd.f32 0.0, %v2129
      %2131 = vmatmul.f32.gmra.mxu0 %v2020
      %v2132 = vpop.f32.mrf.mxu0
      %v2133 = vadd.f32 0.0, %v2132
      %2134 = vmatmul.f32.gmra.mxu0 %v2023
      %v2135 = vpop.f32.mrf.mxu0
      %v2136 = vadd.f32 0.0, %v2135
      %2137 = vmatmul.f32.gmra.mxu0 %v2026
      %v2138 = vpop.f32.mrf.mxu0
      %v2139 = vadd.f32 0.0, %v2138
      %2140 = vmatmul.f32.gmra.mxu0 %v2029
      %v2141 = vpop.f32.mrf.mxu0
      %v2142 = vadd.f32 0.0, %v2141
      %2143 = vmatmul.f32.gmra.mxu0 %v2032
      %v2144 = vpop.f32.mrf.mxu0
      %v2145 = vadd.f32 0.0, %v2144
      %2146 = vmatmul.f32.gmra.mxu0 %v2035
      %v2147 = vpop.f32.mrf.mxu0
      %v2148 = vadd.f32 0.0, %v2147
      %2149 = vmatmul.f32.gmra.mxu0 %v2038
      %v2150 = vpop.f32.mrf.mxu0
      %v2151 = vadd.f32 0.0, %v2150
      %2152 = vmatmul.f32.gmra.mxu0 %v2041
      %v2153 = vpop.f32.mrf.mxu0
      %v2154 = vadd.f32 0.0, %v2153
      %2155 = vmatmul.f32.gmra.mxu0 %v2044
      %v2156 = vpop.f32.mrf.mxu0
      %v2157 = vadd.f32 0.0, %v2156
      %2158 = vmatmul.f32.gmra.mxu0 %v2047
      %v2159 = vpop.f32.mrf.mxu0
      %v2160 = vadd.f32 0.0, %v2159
      %2161 = vmatmul.f32.gmra.mxu0 %v2050
      %v2162 = vpop.f32.mrf.mxu0
      %v2163 = vadd.f32 0.0, %v2162
      %2164 = vmatmul.f32.gmra.mxu0 %v2053
      %v2165 = vpop.f32.mrf.mxu0
      %v2166 = vadd.f32 0.0, %v2165
      %2167 = vmatmul.f32.gmra.mxu0 %v2056
      %v2168 = vpop.f32.mrf.mxu0
      %v2169 = vadd.f32 0.0, %v2168
      %2170 = vmatmul.f32.gmra.mxu0 %v2059
      %v2171 = vpop.f32.mrf.mxu0
      %v2172 = vadd.f32 0.0, %v2171
      %2173 = vmatmul.f32.gmra.mxu0 %v2062
      %v2174 = vpop.f32.mrf.mxu0
      %v2175 = vadd.f32 0.0, %v2174
      %2176 = vmatmul.f32.gmra.mxu0 %v2065
      %v2177 = vpop.f32.mrf.mxu0
      %v2178 = vadd.f32 0.0, %v2177
      %2179 = vmatmul.f32.gmra.mxu0 %v2068
      %v2180 = vpop.f32.mrf.mxu0
      %v2181 = vadd.f32 0.0, %v2180
      %2182 = vmatmul.f32.gmra.mxu0 %v2071
      %v2183 = vpop.f32.mrf.mxu0
      %v2184 = vadd.f32 0.0, %v2183
      %2185 = vmatmul.f32.gmra.mxu0 %v2074
      %v2186 = vpop.f32.mrf.mxu0
      %v2187 = vadd.f32 0.0, %v2186
      %2188 = vmatmul.f32.gmra.mxu0 %v2077
      %v2189 = vpop.f32.mrf.mxu0
      %v2190 = vadd.f32 0.0, %v2189
      %2191 = vmatmul.f32.gmra.mxu0 %v2080
      %v2192 = vpop.f32.mrf.mxu0
      %v2193 = vadd.f32 0.0, %v2192
      %2194 = vmatmul.f32.gmra.mxu0 %v2083
      %v2195 = vpop.f32.mrf.mxu0
      %v2196 = vadd.f32 0.0, %v2195
      %2197 = vmatmul.f32.gmra.mxu0 %v2086
      %v2198 = vpop.f32.mrf.mxu0
      %v2199 = vadd.f32 0.0, %v2198
      %2200 = vmatmul.f32.gmra.mxu0 %v2089
      %v2201 = vpop.f32.mrf.mxu0
      %v2202 = vadd.f32 0.0, %v2201
      %2203 = vdwg.mxu0
      %2204 = vst.msk [vmem:[%s197] sm:$0xff] %vm231, %v2109
      %2205 = vst.msk [vmem:[%s197 + $0x8] sm:$0xff] %vm231, %v2112
      %2206 = vst.msk [vmem:[%s197 + $0x10] sm:$0xff] %vm231, %v2115
      %2207 = vst.msk [vmem:[%s197 + $0x18] sm:$0xff] %vm231, %v2118
      %2208 = vst.msk [vmem:[%s197 + $0x20] sm:$0xff] %vm231, %v2121
      %2209 = vst.msk [vmem:[%s197 + $0x28] sm:$0xff] %vm231, %v2124
      %2210 = vst.msk [vmem:[%s197 + $0x30] sm:$0xff] %vm231, %v2127
      %2211 = vst.msk [vmem:[%s197 + $0x38] sm:$0xff] %vm231, %v2130
      %2212 = vst.msk [vmem:[%s197 + $0x40] sm:$0xff] %vm231, %v2133
      %2213 = vst.msk [vmem:[%s197 + $0x48] sm:$0xff] %vm231, %v2136
      %2214 = vst.msk [vmem:[%s197 + $0x50] sm:$0xff] %vm231, %v2139
      %2215 = vst.msk [vmem:[%s197 + $0x58] sm:$0xff] %vm231, %v2142
      %2216 = vst.msk [vmem:[%s197 + $0x60] sm:$0xff] %vm231, %v2145
      %2217 = vst.msk [vmem:[%s197 + $0x68] sm:$0xff] %vm231, %v2148
      %2218 = vst.msk [vmem:[%s197 + $0x70] sm:$0xff] %vm231, %v2151
      %2219 = vst.msk [vmem:[%s197 + $0x78] sm:$0xff] %vm231, %v2154
      %2220 = vst.msk [vmem:[%s197 + $0x80] sm:$0xff] %vm231, %v2157
      %2221 = vst.msk [vmem:[%s197 + $0x88] sm:$0xff] %vm231, %v2160
      %2222 = vst.msk [vmem:[%s197 + $0x90] sm:$0xff] %vm231, %v2163
      %2223 = vst.msk [vmem:[%s197 + $0x98] sm:$0xff] %vm231, %v2166
      %2224 = vst.msk [vmem:[%s197 + $0xa0] sm:$0xff] %vm231, %v2169
      %2225 = vst.msk [vmem:[%s197 + $0xa8] sm:$0xff] %vm231, %v2172
      %2226 = vst.msk [vmem:[%s197 + $0xb0] sm:$0xff] %vm231, %v2175
      %2227 = vst.msk [vmem:[%s197 + $0xb8] sm:$0xff] %vm231, %v2178
      %2228 = vst.msk [vmem:[%s197 + $0xc0] sm:$0xff] %vm231, %v2181
      %2229 = vst.msk [vmem:[%s197 + $0xc8] sm:$0xff] %vm231, %v2184
      %2230 = vst.msk [vmem:[%s197 + $0xd0] sm:$0xff] %vm231, %v2187
      %2231 = vst.msk [vmem:[%s197 + $0xd8] sm:$0xff] %vm231, %v2190
      %2232 = vst.msk [vmem:[%s197 + $0xe0] sm:$0xff] %vm231, %v2193
      %2233 = vst.msk [vmem:[%s197 + $0xe8] sm:$0xff] %vm231, %v2196
      %2234 = vst.msk [vmem:[%s197 + $0xf0] sm:$0xff] %vm231, %v2199
      %2235 = vst.msk [vmem:[%s197 + $0xf8] sm:$0xff] %vm231, %v2202
      %p2236 = scmp.lt.s32.totalorder %s15, 1
      %s2237 = scalar_select %p2236, %s15, 1
      %s2238 = smul.addr %s2237, 32
      %s2239 = smul.addr %s2238, 8
      %s2240 = scalar_lea.vmem %s4, %s2239
      // Predicated region
      $region37: #{feedforward.1} parent=35 // pred_check
        %p2241 = pneg %p122
      $region38: #{feedforward.1} parent=35 // pred_check_branch
        %2243 = sbr.rel (%p2241) target = $region40
      $region39: #{feedforward.1} parent=35 // pred_region
        _
      $region40: #{feedforward.1} parent=35 // pred_fallthru
        _
    $region36: #{feedforward.1} parent=5 // pred_fallthru
      _
    %p2244 = scmp.le.s32.totalorder 2, %s10
    // Predicated region
    $region41: #{feedforward.1} parent=5 // pred_check
      %p2245 = pneg %p2244
    $region42: #{feedforward.1} parent=5 // pred_check_branch
      %2247 = sbr.rel (%p2245) target = $region44
    $region43: #{feedforward.1} parent=5 // pred_region
      %s2248 = ssub.s32 %s10, 2
      // Predicated region
      $region45: #{feedforward.1} parent=43 // pred_check
        %p2249 = pneg %p128
      $region46: #{feedforward.1} parent=43 // pred_check_branch
        %2251 = sbr.rel (%p2249) target = $region48
      $region47: #{feedforward.1} parent=43 // pred_region
        %p2252 = scmp.lt.s32.totalorder %s16, 1
        %s2253 = scalar_select %p2252, %s16, 1
        %s2254 = smul.addr %s2253, 32
        %s2255 = smul.addr %s2254, 8
        %s2256 = scalar_lea.vmem %s4, %s2255
      $region48: #{feedforward.1} parent=43 // pred_fallthru
        _
    $region44: #{feedforward.1} parent=5 // pred_fallthru
      _
  $region6: #{feedforward.1} parent=0 // loop_footer
    %s14 = sadd.s32 1, %s10
  $region7: #{feedforward.1} parent=0 // loop_footer_branch
    %9 = sbr.rel target = $region3
  $region8: #{feedforward.1} parent=0 // loop_exit
    _

</llo_original>
